<compile_context>
chip_gen: v7x
topology: tpu7x:2x2x1
jax: 0.10.0
libtpu: 0.0.40
codegen_flags: <defaults>
</compile_context>

<pallas_src>
import functools

import jax
import jax.numpy as jnp
from jax import lax
from jax.experimental import pallas as pl
from jax.experimental.pallas import tpu as pltpu


def _round_up(x, m):
    return (x + m - 1) // m * m


def _softplus(x):
    # softplus(x) = max(x,0) + log1p(exp(-|x|)); exp/log lower to EUP ops.
    return jnp.maximum(x, 0.0) + jnp.log(1.0 + jnp.exp(-jnp.abs(x)))


def asm2vec_fwd_kernel(idx_ref, embblk_ref, embf_ref, embrt_ref, loss_ref, *,
                       num_pos, num_neg, batch_total):
    """Fused ASM2VEC negative-sampling forward, one batch tile per grid step.

    idx_ref    : (Bb, 7+PN) int32  packed [fn | ctx0..ctx5 | pos.. | neg..]
    embblk_ref : (2V, 2E)   f32    block-diag [[emb,0],[0,emb]] context table
    embf_ref   : (F, 2E)    f32    function-embedding table
    embrt_ref  : (2E, V)    f32    output-embedding table, pre-transposed
    loss_ref   : (1, 1)     f32    per-tile SUM of BCE terms (SMEM)
    """
    Bb = idx_ref.shape[0]
    F = embf_ref.shape[0]
    _, V = embrt_ref.shape
    two_v = embblk_ref.shape[0]
    pn = num_pos + num_neg

    idx = idx_ref[...]                                            # (Bb, 7+PN)

    # ---- function-embedding gather: one-hot (Bb, F) @ (F, 2E) on the MXU ----
    # NOTE: out-of-range ids produce an all-zero row (zero embedding) rather
    # than an error; callers must guarantee in-range ids.
    fn_idx = idx[:, 0:1]                                          # (Bb, 1)
    f_iota = lax.broadcasted_iota(jnp.int32, (Bb, F), 1)
    v_f = jnp.dot((f_iota == fn_idx).astype(jnp.float32), embf_ref[...],
                  preferred_element_type=jnp.float32,
                  precision=lax.Precision.HIGHEST)                # (Bb, 2E)

    # ---- context embeddings: v_prev + v_next in ONE lane-dense matmul ----
    # v_prev + v_next = [e0 + e3 | (e1+e2)/2 + (e4+e5)/2] = A @ [[emb,0],[0,emb]]
    # (multi-hot A: weight-1 hits in lanes [0,V), weight-0.5 hits in [V,2V)).
    iota2v = lax.broadcasted_iota(jnp.int32, (Bb, two_v), 1)      # (Bb, 2V)

    def hot(col, offset):
        return (iota2v == (idx[:, col:col + 1] + offset)).astype(jnp.float32)

    a = (hot(1, 0) + hot(4, 0)
         + 0.5 * (hot(2, V) + hot(3, V) + hot(5, V) + hot(6, V)))
    v_ctx = jnp.dot(a, embblk_ref[...], preferred_element_type=jnp.float32,
                    precision=lax.Precision.HIGHEST)              # (Bb, 2E)

    v = (v_f + v_ctx) * (1.0 / 3.0)                               # (Bb, 2E)

    # ---- dual form of the output-embedding gather ----
    # pred[b,p] = <emb_r[tok[b,p]], v[b]> = scores[b, tok[b,p]]
    scores = jnp.dot(v, embrt_ref[...], preferred_element_type=jnp.float32,
                     precision=lax.Precision.HIGHEST)             # (Bb, V)

    tok = idx[:, 7:7 + pn]                                        # (Bb, PN)
    v_iota = lax.broadcasted_iota(jnp.int32, (Bb, pn, V), 2)
    sel = (v_iota == tok[:, :, None]).astype(jnp.float32)         # (Bb, PN, V)
    pred = jnp.sum(sel * scores[:, None, :], axis=-1)             # (Bb, PN)

    # ---- BCE(sigmoid(pred), cat([ones, zeros])), per-tile SUM ----
    col = lax.broadcasted_iota(jnp.int32, (Bb, pn), 1)
    label = (col < num_pos).astype(jnp.float32)
    # log(sigmoid(x)) = -softplus(-x); log(1-sigmoid(x)) = -softplus(x);
    # clamp at -100 to match nn.BCELoss.
    log_p = jnp.maximum(-_softplus(-pred), -100.0)
    log_1mp = jnp.maximum(-_softplus(pred), -100.0)
    bce = -(label * log_p + (1.0 - label) * log_1mp)

    # Mask rows added by batch padding (global row index >= real batch size).
    row = lax.broadcasted_iota(jnp.int32, (Bb, 1), 0) + pl.program_id(0) * Bb
    valid = (row < batch_total).astype(jnp.float32)
    loss_ref[0, 0] = jnp.sum(bce * valid)


def prepare_tables(params):
    """Built once (not per forward call): block-diag context table + emb_r^T."""
    emb = params["embeddings"]        # (V, E)
    V, E = emb.shape
    emb_blk = jnp.zeros((2 * V, 2 * E), emb.dtype)
    emb_blk = emb_blk.at[:V, :E].set(emb).at[V:, E:].set(emb)
    # TODO(synk): at real vocab sizes drop the half-zero block-diag table and
    # the one-hot gathers in favour of DMA row gathers (scalar prefetch).
    return {
        "emb_blk": emb_blk,                      # (2V, 2E)
        "emb_f": params["embeddings_f"],         # (F, 2E)
        "emb_r_t": params["embeddings_r"].T,     # (2E, V)
    }


def asm2vec_forward(tables, inp, pos, neg, *, block_b=128):
    emb_blk, emb_f, emb_r_t = tables["emb_blk"], tables["emb_f"], tables["emb_r_t"]
    B = inp.shape[0]
    n_pos, n_neg = pos.shape[1], neg.shape[1]
    pn = n_pos + n_neg

    # One lane-dense packed index array: [fn | ctx0..5 | pos.. | neg..].
    idx = jnp.concatenate(
        [inp.astype(jnp.int32), pos.astype(jnp.int32), neg.astype(jnp.int32)],
        axis=1)                                                   # (B, 7+PN)

    # Batch tile: >=128 rows when the batch allows, multiple of 8 sublanes.
    bb = min(block_b, _round_up(B, 8))
    bb = _round_up(bb, 8)
    b_pad = _round_up(B, bb)
    if b_pad != B:
        idx = jnp.pad(idx, ((0, b_pad - B), (0, 0)))   # pad rows masked in-kernel
    num_tiles = b_pad // bb

    kernel = functools.partial(asm2vec_fwd_kernel, num_pos=n_pos,
                               num_neg=n_neg, batch_total=B)
    partial = pl.pallas_call(
        kernel,
        out_shape=jax.ShapeDtypeStruct((num_tiles, 1), jnp.float32),
        grid=(num_tiles,),
        in_specs=[
            # streamed per-tile index block
            pl.BlockSpec((bb, 7 + pn), lambda i: (i, 0)),
            # resident tables: constant index_map -> DMA'd once, stay in VMEM
            pl.BlockSpec(emb_blk.shape, lambda i: (0, 0)),
            pl.BlockSpec(emb_f.shape, lambda i: (0, 0)),
            pl.BlockSpec(emb_r_t.shape, lambda i: (0, 0)),
        ],
        out_specs=pl.BlockSpec((1, 1), lambda i: (i, 0),
                               memory_space=pltpu.MemorySpace.SMEM),
        compiler_params=pltpu.CompilerParams(
            dimension_semantics=("parallel",),       # both TCs on v7x
            vmem_limit_bytes=32 * 1024 * 1024),      # safe on v5e/v6e/v7x
    )(idx, emb_blk, emb_f, emb_r_t)

    return jnp.sum(partial) / float(B * pn)


def asm2vec_reference(params, inp, pos, neg):
    """Pure-JAX reference mirroring the PyTorch forward."""
    emb, emb_f, emb_r = (params["embeddings"], params["embeddings_f"],
                         params["embeddings_r"])
    e = jnp.take(emb, inp[:, 1:], axis=0)
    v_f = jnp.take(emb_f, inp[:, 0], axis=0)
    v_prev = jnp.concatenate([e[:, 0], (e[:, 1] + e[:, 2]) / 2], axis=1)
    v_next = jnp.concatenate([e[:, 3], (e[:, 4] + e[:, 5]) / 2], axis=1)
    v = (v_f + v_prev + v_next) / 3
    r = jnp.take(emb_r, jnp.concatenate([pos, neg], axis=1), axis=0)
    pred = jnp.einsum("bpk,bk->bp", r, v, precision="highest")
    prob = jax.nn.sigmoid(pred)
    label = jnp.concatenate(
        [jnp.ones((inp.shape[0], pos.shape[1])),
         jnp.zeros((inp.shape[0], neg.shape[1]))], axis=1)
    bce = -(label * jnp.maximum(jnp.log(prob), -100.0)
            + (1.0 - label) * jnp.maximum(jnp.log(1.0 - prob), -100.0))
    return jnp.mean(bce)


if __name__ == "__main__":
    # Small, module-consistent shapes: 2E = 128 keeps everything lane-dense.
    vocab_size, function_size, embedding_size = 64, 16, 64
    B, n_pos, n_neg = 8, 3, 5

    key = jax.random.PRNGKey(0)
    k_e, k_f, k_r, k_inp0, k_inp, k_pos, k_neg = jax.random.split(key, 7)

    # The module inits `embeddings` to zeros; use small non-zero values here so
    # the context-gather path is numerically exercised (forward semantics are
    # identical for any weights).
    params = {
        "embeddings": (jax.random.uniform(k_e, (vocab_size, embedding_size)) - 0.5)
        / embedding_size / 2,
        "embeddings_f": (jax.random.uniform(k_f, (function_size, 2 * embedding_size)) - 0.5)
        / embedding_size / 2,
        "embeddings_r": (jax.random.uniform(k_r, (vocab_size, 2 * embedding_size)) - 0.5)
        / embedding_size / 2,
    }

    inp = jnp.concatenate(
        [
            jax.random.randint(k_inp0, (B, 1), 0, function_size, dtype=jnp.int32),
            jax.random.randint(k_inp, (B, 6), 0, vocab_size, dtype=jnp.int32),
        ],
        axis=1,
    )                                                            # (B, 7)
    pos = jax.random.randint(k_pos, (B, n_pos), 0, vocab_size, dtype=jnp.int32)
    neg = jax.random.randint(k_neg, (B, n_neg), 0, vocab_size, dtype=jnp.int32)

    tables = prepare_tables(params)        # built once, reused every forward
    loss = asm2vec_forward(tables, inp, pos, neg)
    jax.block_until_ready(loss)

    ref = asm2vec_reference(params, inp, pos, neg)
    assert jnp.allclose(loss, ref, rtol=1e-5, atol=1e-5), (loss, ref)

    print("KERNEL_OK")
</pallas_src>

<mosaic_0001>
module attributes {stable_mosaic.version = 11 : i64} {
  func.func @asm2vec_fwd_kernel(%arg0: i32, %arg1: memref<8x15xi32, #tpu.memory_space<vmem>>, %arg2: memref<128x128xf32, #tpu.memory_space<vmem>>, %arg3: memref<16x128xf32, #tpu.memory_space<vmem>>, %arg4: memref<128x64xf32, #tpu.memory_space<vmem>>, %arg5: memref<1x1xf32, #tpu.memory_space<smem>>) attributes {dimension_semantics = [#tpu.dimension_semantics<parallel>], iteration_bounds = array<i64: 1>, scalar_prefetch = 0 : i64, scratch_operands = 0 : i64, tpu.core_type = #tpu.core_type<tc>, window_params = [{transform_indices = @transform_0, window_bounds = array<i64: 8, 15>}, {pipeline_mode = #tpu.pipeline_mode<synchronous>, transform_indices = @transform_1, window_bounds = array<i64: 128, 128>}, {pipeline_mode = #tpu.pipeline_mode<synchronous>, transform_indices = @transform_2, window_bounds = array<i64: 16, 128>}, {pipeline_mode = #tpu.pipeline_mode<synchronous>, transform_indices = @transform_3, window_bounds = array<i64: 128, 64>}, {transform_indices = @transform_4, window_bounds = array<i64: 1, 1>}]} {
    %c0 = arith.constant 0 : index
    %c0_0 = arith.constant 0 : index
    %0 = vector.load %arg1[%c0, %c0_0] : memref<8x15xi32, #tpu.memory_space<vmem>>, vector<8x15xi32>
    %1 = vector.extract_strided_slice %0 {offsets = [0, 0], sizes = [8, 1], strides = [1, 1]} : vector<8x15xi32> to vector<8x1xi32>
    %2 = tpu.iota {dimensions = array<i32: 1>} : vector<8x16xi32>
    %3 = vector.broadcast %1 : vector<8x1xi32> to vector<8x16xi32>
    %4 = arith.cmpi eq, %2, %3 : vector<8x16xi32>
    %5 = arith.extui %4 : vector<8x16xi1> to vector<8x16xi32>
    %6 = arith.sitofp %5 : vector<8x16xi32> to vector<8x16xf32>
    %c0_1 = arith.constant 0 : index
    %c0_2 = arith.constant 0 : index
    %7 = vector.load %arg3[%c0_1, %c0_2] : memref<16x128xf32, #tpu.memory_space<vmem>>, vector<16x128xf32>
    %cst = arith.constant dense<0.000000e+00> : vector<8x128xf32>
    %8 = tpu.matmul %6, %7, %cst {dimension_numbers = #tpu.dot_dimension_numbers<[1], [0], [0], [1], [0, 0, 1, 1], [], []>, precision = #tpu.contract_precision<fp32>} : vector<8x16xf32>, vector<16x128xf32>, vector<8x128xf32> -> vector<8x128xf32>
    %9 = tpu.iota {dimensions = array<i32: 1>} : vector<8x128xi32>
    %10 = vector.extract_strided_slice %0 {offsets = [0, 1], sizes = [8, 1], strides = [1, 1]} : vector<8x15xi32> to vector<8x1xi32>
    %c0_i32 = arith.constant 0 : i32
    %11 = vector.broadcast %c0_i32 : i32 to vector<8x1xi32>
    %12 = arith.addi %10, %11 : vector<8x1xi32>
    %13 = vector.broadcast %12 : vector<8x1xi32> to vector<8x128xi32>
    %14 = arith.cmpi eq, %9, %13 : vector<8x128xi32>
    %15 = arith.extui %14 : vector<8x128xi1> to vector<8x128xi32>
    %16 = arith.sitofp %15 : vector<8x128xi32> to vector<8x128xf32>
    %17 = vector.extract_strided_slice %0 {offsets = [0, 4], sizes = [8, 1], strides = [1, 1]} : vector<8x15xi32> to vector<8x1xi32>
    %c0_i32_3 = arith.constant 0 : i32
    %18 = vector.broadcast %c0_i32_3 : i32 to vector<8x1xi32>
    %19 = arith.addi %17, %18 : vector<8x1xi32>
    %20 = vector.broadcast %19 : vector<8x1xi32> to vector<8x128xi32>
    %21 = arith.cmpi eq, %9, %20 : vector<8x128xi32>
    %22 = arith.extui %21 : vector<8x128xi1> to vector<8x128xi32>
    %23 = arith.sitofp %22 : vector<8x128xi32> to vector<8x128xf32>
    %24 = arith.addf %16, %23 : vector<8x128xf32>
    %25 = vector.extract_strided_slice %0 {offsets = [0, 2], sizes = [8, 1], strides = [1, 1]} : vector<8x15xi32> to vector<8x1xi32>
    %c64_i32 = arith.constant 64 : i32
    %26 = vector.broadcast %c64_i32 : i32 to vector<8x1xi32>
    %27 = arith.addi %25, %26 : vector<8x1xi32>
    %28 = vector.broadcast %27 : vector<8x1xi32> to vector<8x128xi32>
    %29 = arith.cmpi eq, %9, %28 : vector<8x128xi32>
    %30 = arith.extui %29 : vector<8x128xi1> to vector<8x128xi32>
    %31 = arith.sitofp %30 : vector<8x128xi32> to vector<8x128xf32>
    %32 = vector.extract_strided_slice %0 {offsets = [0, 3], sizes = [8, 1], strides = [1, 1]} : vector<8x15xi32> to vector<8x1xi32>
    %c64_i32_4 = arith.constant 64 : i32
    %33 = vector.broadcast %c64_i32_4 : i32 to vector<8x1xi32>
    %34 = arith.addi %32, %33 : vector<8x1xi32>
    %35 = vector.broadcast %34 : vector<8x1xi32> to vector<8x128xi32>
    %36 = arith.cmpi eq, %9, %35 : vector<8x128xi32>
    %37 = arith.extui %36 : vector<8x128xi1> to vector<8x128xi32>
    %38 = arith.sitofp %37 : vector<8x128xi32> to vector<8x128xf32>
    %39 = arith.addf %31, %38 : vector<8x128xf32>
    %40 = vector.extract_strided_slice %0 {offsets = [0, 5], sizes = [8, 1], strides = [1, 1]} : vector<8x15xi32> to vector<8x1xi32>
    %c64_i32_5 = arith.constant 64 : i32
    %41 = vector.broadcast %c64_i32_5 : i32 to vector<8x1xi32>
    %42 = arith.addi %40, %41 : vector<8x1xi32>
    %43 = vector.broadcast %42 : vector<8x1xi32> to vector<8x128xi32>
    %44 = arith.cmpi eq, %9, %43 : vector<8x128xi32>
    %45 = arith.extui %44 : vector<8x128xi1> to vector<8x128xi32>
    %46 = arith.sitofp %45 : vector<8x128xi32> to vector<8x128xf32>
    %47 = arith.addf %39, %46 : vector<8x128xf32>
    %48 = vector.extract_strided_slice %0 {offsets = [0, 6], sizes = [8, 1], strides = [1, 1]} : vector<8x15xi32> to vector<8x1xi32>
    %c64_i32_6 = arith.constant 64 : i32
    %49 = vector.broadcast %c64_i32_6 : i32 to vector<8x1xi32>
    %50 = arith.addi %48, %49 : vector<8x1xi32>
    %51 = vector.broadcast %50 : vector<8x1xi32> to vector<8x128xi32>
    %52 = arith.cmpi eq, %9, %51 : vector<8x128xi32>
    %53 = arith.extui %52 : vector<8x128xi1> to vector<8x128xi32>
    %54 = arith.sitofp %53 : vector<8x128xi32> to vector<8x128xf32>
    %55 = arith.addf %47, %54 : vector<8x128xf32>
    %cst_7 = arith.constant 5.000000e-01 : f32
    %56 = vector.broadcast %cst_7 : f32 to vector<8x128xf32>
    %57 = arith.mulf %56, %55 : vector<8x128xf32>
    %58 = arith.addf %24, %57 : vector<8x128xf32>
    %c0_8 = arith.constant 0 : index
    %c0_9 = arith.constant 0 : index
    %59 = vector.load %arg2[%c0_8, %c0_9] : memref<128x128xf32, #tpu.memory_space<vmem>>, vector<128x128xf32>
    %cst_10 = arith.constant dense<0.000000e+00> : vector<8x128xf32>
    %60 = tpu.matmul %58, %59, %cst_10 {dimension_numbers = #tpu.dot_dimension_numbers<[1], [0], [0], [1], [0, 0, 1, 1], [], []>, precision = #tpu.contract_precision<fp32>} : vector<8x128xf32>, vector<128x128xf32>, vector<8x128xf32> -> vector<8x128xf32>
    %61 = arith.addf %8, %60 : vector<8x128xf32>
    %cst_11 = arith.constant 0.333333343 : f32
    %62 = vector.broadcast %cst_11 : f32 to vector<8x128xf32>
    %63 = arith.mulf %61, %62 : vector<8x128xf32>
    %c0_12 = arith.constant 0 : index
    %c0_13 = arith.constant 0 : index
    %64 = vector.load %arg4[%c0_12, %c0_13] : memref<128x64xf32, #tpu.memory_space<vmem>>, vector<128x64xf32>
    %cst_14 = arith.constant dense<0.000000e+00> : vector<8x64xf32>
    %65 = tpu.matmul %63, %64, %cst_14 {dimension_numbers = #tpu.dot_dimension_numbers<[1], [0], [0], [1], [0, 0, 1, 1], [], []>, precision = #tpu.contract_precision<fp32>} : vector<8x128xf32>, vector<128x64xf32>, vector<8x64xf32> -> vector<8x64xf32>
    %66 = vector.extract_strided_slice %0 {offsets = [0, 7], sizes = [8, 8], strides = [1, 1]} : vector<8x15xi32> to vector<8x8xi32>
    %67 = tpu.iota {dimensions = array<i32: 2>} : vector<8x8x64xi32>
    %68 = vector.shape_cast %66 : vector<8x8xi32> to vector<8x8x1xi32>
    %69 = vector.broadcast %68 : vector<8x8x1xi32> to vector<8x8x64xi32>
    %70 = arith.cmpi eq, %67, %69 : vector<8x8x64xi32>
    %71 = arith.extui %70 : vector<8x8x64xi1> to vector<8x8x64xi32>
    %72 = arith.sitofp %71 : vector<8x8x64xi32> to vector<8x8x64xf32>
    %73 = vector.shape_cast %65 : vector<8x64xf32> to vector<8x1x64xf32>
    %74 = vector.broadcast %73 : vector<8x1x64xf32> to vector<8x8x64xf32>
    %75 = arith.mulf %72, %74 : vector<8x8x64xf32>
    %cst_15 = arith.constant dense<0.000000e+00> : vector<8x8xf32>
    %76 = vector.multi_reduction <add>, %75, %cst_15 [2] : vector<8x8x64xf32> to vector<8x8xf32>
    %77 = tpu.iota {dimensions = array<i32: 1>} : vector<8x8xi32>
    %c3_i32 = arith.constant 3 : i32
    %78 = vector.broadcast %c3_i32 : i32 to vector<8x8xi32>
    %79 = arith.cmpi slt, %77, %78 : vector<8x8xi32>
    %80 = arith.extui %79 : vector<8x8xi1> to vector<8x8xi32>
    %81 = arith.sitofp %80 : vector<8x8xi32> to vector<8x8xf32>
    %cst_16 = arith.constant 0.000000e+00 : f32
    %82 = vector.broadcast %cst_16 : f32 to vector<8x8xf32>
    %83 = arith.subf %82, %76 : vector<8x8xf32>
    %cst_17 = arith.constant 0.000000e+00 : f32
    %84 = vector.broadcast %cst_17 : f32 to vector<8x8xf32>
    %85 = arith.maximumf %83, %84 : vector<8x8xf32>
    %86 = math.absf %83 : vector<8x8xf32>
    %cst_18 = arith.constant 0.000000e+00 : f32
    %87 = vector.broadcast %cst_18 : f32 to vector<8x8xf32>
    %88 = arith.subf %87, %86 : vector<8x8xf32>
    %89 = math.exp %88 : vector<8x8xf32>
    %cst_19 = arith.constant 1.000000e+00 : f32
    %90 = vector.broadcast %cst_19 : f32 to vector<8x8xf32>
    %91 = arith.addf %90, %89 : vector<8x8xf32>
    %92 = math.log %91 : vector<8x8xf32>
    %93 = arith.addf %85, %92 : vector<8x8xf32>
    %cst_20 = arith.constant 0.000000e+00 : f32
    %94 = vector.broadcast %cst_20 : f32 to vector<8x8xf32>
    %95 = arith.subf %94, %93 : vector<8x8xf32>
    %cst_21 = arith.constant -1.000000e+02 : f32
    %96 = vector.broadcast %cst_21 : f32 to vector<8x8xf32>
    %97 = arith.maximumf %95, %96 : vector<8x8xf32>
    %cst_22 = arith.constant 0.000000e+00 : f32
    %98 = vector.broadcast %cst_22 : f32 to vector<8x8xf32>
    %99 = arith.maximumf %76, %98 : vector<8x8xf32>
    %100 = math.absf %76 : vector<8x8xf32>
    %cst_23 = arith.constant 0.000000e+00 : f32
    %101 = vector.broadcast %cst_23 : f32 to vector<8x8xf32>
    %102 = arith.subf %101, %100 : vector<8x8xf32>
    %103 = math.exp %102 : vector<8x8xf32>
    %cst_24 = arith.constant 1.000000e+00 : f32
    %104 = vector.broadcast %cst_24 : f32 to vector<8x8xf32>
    %105 = arith.addf %104, %103 : vector<8x8xf32>
    %106 = math.log %105 : vector<8x8xf32>
    %107 = arith.addf %99, %106 : vector<8x8xf32>
    %cst_25 = arith.constant 0.000000e+00 : f32
    %108 = vector.broadcast %cst_25 : f32 to vector<8x8xf32>
    %109 = arith.subf %108, %107 : vector<8x8xf32>
    %cst_26 = arith.constant -1.000000e+02 : f32
    %110 = vector.broadcast %cst_26 : f32 to vector<8x8xf32>
    %111 = arith.maximumf %109, %110 : vector<8x8xf32>
    %112 = arith.mulf %81, %97 : vector<8x8xf32>
    %cst_27 = arith.constant 1.000000e+00 : f32
    %113 = vector.broadcast %cst_27 : f32 to vector<8x8xf32>
    %114 = arith.subf %113, %81 : vector<8x8xf32>
    %115 = arith.mulf %114, %111 : vector<8x8xf32>
    %116 = arith.addf %112, %115 : vector<8x8xf32>
    %cst_28 = arith.constant 0.000000e+00 : f32
    %117 = vector.broadcast %cst_28 : f32 to vector<8x8xf32>
    %118 = arith.subf %117, %116 : vector<8x8xf32>
    %119 = tpu.iota {dimensions = array<i32: 0>} : vector<8x1xi32>
    %c8_i32 = arith.constant 8 : i32
    %120 = arith.muli %arg0, %c8_i32 : i32
    %121 = vector.broadcast %120 : i32 to vector<8x1xi32>
    %122 = arith.addi %119, %121 : vector<8x1xi32>
    %c8_i32_29 = arith.constant 8 : i32
    %123 = vector.broadcast %c8_i32_29 : i32 to vector<8x1xi32>
    %124 = arith.cmpi slt, %122, %123 : vector<8x1xi32>
    %125 = arith.extui %124 : vector<8x1xi1> to vector<8x1xi32>
    %126 = arith.sitofp %125 : vector<8x1xi32> to vector<8x1xf32>
    %127 = vector.broadcast %126 : vector<8x1xf32> to vector<8x8xf32>
    %128 = arith.mulf %118, %127 : vector<8x8xf32>
    %129 = vector.shape_cast %128 : vector<8x8xf32> to vector<1x8x8xf32>
    %cst_30 = arith.constant dense<0.000000e+00> : vector<1xf32>
    %130 = vector.multi_reduction <add>, %129, %cst_30 [1, 2] : vector<1x8x8xf32> to vector<1xf32>
    %131 = vector.shape_cast %130 : vector<1xf32> to vector<1x1x1xf32>
    %132 = vector.extract %131[0, 0, 0] : f32 from vector<1x1x1xf32>
    %c0_31 = arith.constant 0 : index
    %c0_32 = arith.constant 0 : index
    %133 = memref.load %arg5[%c0_31, %c0_32] : memref<1x1xf32, #tpu.memory_space<smem>>
    memref.store %132, %arg5[%c0_31, %c0_32] : memref<1x1xf32, #tpu.memory_space<smem>>
    return
  }
  func.func @transform_0(%arg0: i32) -> (i32, i32) {
    %c0_i32 = arith.constant 0 : i32
    %c0_i32_0 = arith.constant 0 : i32
    return %arg0, %c0_i32 : i32, i32
  }
  func.func @transform_1(%arg0: i32) -> (i32, i32) {
    %c0_i32 = arith.constant 0 : i32
    %c0_i32_0 = arith.constant 0 : i32
    %c0_i32_1 = arith.constant 0 : i32
    return %c0_i32, %c0_i32_0 : i32, i32
  }
  func.func @transform_2(%arg0: i32) -> (i32, i32) {
    %c0_i32 = arith.constant 0 : i32
    %c0_i32_0 = arith.constant 0 : i32
    %c0_i32_1 = arith.constant 0 : i32
    return %c0_i32, %c0_i32_0 : i32, i32
  }
  func.func @transform_3(%arg0: i32) -> (i32, i32) {
    %c0_i32 = arith.constant 0 : i32
    %c0_i32_0 = arith.constant 0 : i32
    %c0_i32_1 = arith.constant 0 : i32
    return %c0_i32, %c0_i32_0 : i32, i32
  }
  func.func @transform_4(%arg0: i32) -> (i32, i32) {
    %c0_i32 = arith.constant 0 : i32
    %c0_i32_0 = arith.constant 0 : i32
    return %arg0, %c0_i32 : i32, i32
  }
}

</mosaic_0001>

<llo_original>
// kernel: tpu_custom_call.1
$region0: #{tpu_custom_call.1}
  #allocation0 [shape = 'u32[]', space=smem, size = 0x4, offset = 0x4, fixed_abs, tag = 'smem constant byte address 0x4 - core index']
  #allocation1 [shape = 'u32[144,128]{1,0:T(1,128)}', space=vmem, size = 0x12000, scoped, tag = 'internal scratch']
  %s0 = inlined_call_operand.vmem [shape: s32[8,15], index: 0, kind: input, shape index: {}]
  %s1 = inlined_call_operand.vmem [shape: f32[128,128], index: 1, kind: input, shape index: {}]
  %s2 = inlined_call_operand.vmem [shape: f32[16,128], index: 2, kind: input, shape index: {}]
  %s3 = inlined_call_operand.vmem [shape: f32[128,64], index: 3, kind: input, shape index: {}]
  %s4 = inlined_call_operand.hbm [shape: f32[1,1], index: 4, kind: output, shape index: {}]
  %s5 = sld [smem:[#allocation0]]
  $region26: #{tpu_custom_call.1} parent=0
    _
  %s7 = ssub.s32 1, %s5
  %s8 = scalar_select 0, %s7, %s5
  $region1: #{tpu_custom_call.1} parent=0
    #allocation2 [shape = 'u8[512]{0}', space=smem, size = 0x200, scoped, tag = 'output window, operand 0, single buffered']
    #allocation3 [shape = 's32[1]{0}', space=sflag, size = 0x4, scoped, tag = 'scoped memory for tpu_custom_call.1']
    %9 = vsyncpa [#allocation3], 0
    // Predicated region
    $region2: #{tpu_custom_call.1} parent=1 // pred_check
      _
    $region3: #{tpu_custom_call.1} parent=1 // pred_check_branch
      %11 = sbr.rel (0) target = $region5
    $region4: #{tpu_custom_call.1} parent=1 // pred_region
      _
    $region5: #{tpu_custom_call.1} parent=1 // pred_fallthru
      _
    // Predicated region
    $region6: #{tpu_custom_call.1} parent=1 // pred_check
      _
    $region7: #{tpu_custom_call.1} parent=1 // pred_check_branch
      %13 = sbr.rel (0) target = $region9
    $region8: #{tpu_custom_call.1} parent=1 // pred_region
      _
    $region9: #{tpu_custom_call.1} parent=1 // pred_fallthru
      _
    // Predicated region
    $region10: #{tpu_custom_call.1} parent=1 // pred_check
      _
    $region11: #{tpu_custom_call.1} parent=1 // pred_check_branch
      %15 = sbr.rel (0) target = $region13
    $region12: #{tpu_custom_call.1} parent=1 // pred_region
      _
    $region13: #{tpu_custom_call.1} parent=1 // pred_fallthru
      _
    // Predicated region
    $region14: #{tpu_custom_call.1} parent=1 // pred_check
      _
    $region15: #{tpu_custom_call.1} parent=1 // pred_check_branch
      %17 = sbr.rel (0) target = $region17
    $region16: #{tpu_custom_call.1} parent=1 // pred_region
      _
    $region17: #{tpu_custom_call.1} parent=1 // pred_fallthru
      _
    %v18 = vld [vmem:[%s0] sm:$0xff]
    %v19 = vlaneseq
    %v20 = vand.u32 %v19, 127
    %21 = vset.pattern.permute.xlu0 0
    %22 = vperm.xlu0 %21, %v18
    %v23 = vpop.permute.xlu0 %22
    %vm24 = vcmp.eq.s32.totalorder %v20, %v23
    %v25 = vsel %vm24, 1, 0
    %v26 = vcvt.s32.f32 %v25
    %v27 = vld [vmem:[%s2] sm:$0xff]
    %v28 = vld [vmem:[%s2 + $0x8] sm:$0xff]
    %29 = vset.pattern.permute.xlu0 1
    %30 = vperm.xlu0 %29, %v18
    %v31 = vpop.permute.xlu0 %30
    %vm32 = vcmp.eq.s32.totalorder %v20, %v31
    %v33 = vsel %vm32, 1, 0
    %v34 = vcvt.s32.f32 %v33
    %35 = vset.pattern.permute.xlu0 4
    %36 = vperm.xlu0 %35, %v18
    %v37 = vpop.permute.xlu0 %36
    %vm38 = vcmp.eq.s32.totalorder %v20, %v37
    %v39 = vsel %vm38, 1, 0
    %v40 = vcvt.s32.f32 %v39
    %v41 = vadd.f32 %v34, %v40
    %v42 = vadd.s32 %v18, 64
    %43 = vset.pattern.permute.xlu0 2
    %44 = vperm.xlu0 %43, %v42
    %v45 = vpop.permute.xlu0 %44
    %vm46 = vcmp.eq.s32.totalorder %v20, %v45
    %v47 = vsel %vm46, 1, 0
    %v48 = vcvt.s32.f32 %v47
    %49 = vset.pattern.permute.xlu0 3
    %50 = vperm.xlu0 %49, %v42
    %v51 = vpop.permute.xlu0 %50
    %vm52 = vcmp.eq.s32.totalorder %v20, %v51
    %v53 = vsel %vm52, 1, 0
    %v54 = vcvt.s32.f32 %v53
    %v55 = vadd.f32 %v48, %v54
    %56 = vset.pattern.permute.xlu0 5
    %57 = vperm.xlu0 %56, %v42
    %v58 = vpop.permute.xlu0 %57
    %vm59 = vcmp.eq.s32.totalorder %v20, %v58
    %v60 = vsel %vm59, 1, 0
    %v61 = vcvt.s32.f32 %v60
    %v62 = vadd.f32 %v55, %v61
    %63 = vset.pattern.permute.xlu0 6
    %64 = vperm.xlu0 %63, %v42
    %v65 = vpop.permute.xlu0 %64
    %vm66 = vcmp.eq.s32.totalorder %v20, %v65
    %v67 = vsel %vm66, 1, 0
    %v68 = vcvt.s32.f32 %v67
    %v69 = vadd.f32 %v62, %v68
    %v70 = vmul.f32 %v69, 0.5
    %v71 = vadd.f32 %v41, %v70
    %v72 = vld [vmem:[%s1] sm:$0xff]
    %v73 = vld [vmem:[%s1 + $0x8] sm:$0xff]
    %v74 = vld [vmem:[%s1 + $0x10] sm:$0xff]
    %v75 = vld [vmem:[%s1 + $0x18] sm:$0xff]
    %v76 = vld [vmem:[%s1 + $0x20] sm:$0xff]
    %v77 = vld [vmem:[%s1 + $0x28] sm:$0xff]
    %v78 = vld [vmem:[%s1 + $0x30] sm:$0xff]
    %v79 = vld [vmem:[%s1 + $0x38] sm:$0xff]
    %v80 = vld [vmem:[%s1 + $0x40] sm:$0xff]
    %v81 = vld [vmem:[%s1 + $0x48] sm:$0xff]
    %v82 = vld [vmem:[%s1 + $0x50] sm:$0xff]
    %v83 = vld [vmem:[%s1 + $0x58] sm:$0xff]
    %v84 = vld [vmem:[%s1 + $0x60] sm:$0xff]
    %v85 = vld [vmem:[%s1 + $0x68] sm:$0xff]
    %v86 = vld [vmem:[%s1 + $0x70] sm:$0xff]
    %v87 = vld [vmem:[%s1 + $0x78] sm:$0xff]
    %88 = vmatprep.subr.mxu0 0.0
    %v89 = vand.u32 %v72, 4294901760
    %90 = vmatpush1.msra.mxu0 %v89
    %91 = vmatprep.subr.mxu0 0.0
    %v92 = vand.u32 %v73, 4294901760
    %93 = vmatpush1.msra.mxu0 %v92
    %94 = vmatprep.subr.mxu0 0.0
    %v95 = vand.u32 %v74, 4294901760
    %96 = vmatpush1.msra.mxu0 %v95
    %97 = vmatprep.subr.mxu0 0.0
    %v98 = vand.u32 %v75, 4294901760
    %99 = vmatpush1.msra.mxu0 %v98
    %100 = vmatprep.subr.mxu0 0.0
    %v101 = vand.u32 %v76, 4294901760
    %102 = vmatpush1.msra.mxu0 %v101
    %103 = vmatprep.subr.mxu0 0.0
    %v104 = vand.u32 %v77, 4294901760
    %105 = vmatpush1.msra.mxu0 %v104
    %106 = vmatprep.subr.mxu0 0.0
    %v107 = vand.u32 %v78, 4294901760
    %108 = vmatpush1.msra.mxu0 %v107
    %109 = vmatprep.subr.mxu0 0.0
    %v110 = vand.u32 %v79, 4294901760
    %111 = vmatpush1.msra.mxu0 %v110
    %112 = vmatprep.subr.mxu0 0.0
    %v113 = vand.u32 %v80, 4294901760
    %114 = vmatpush1.msra.mxu0 %v113
    %115 = vmatprep.subr.mxu0 0.0
    %v116 = vand.u32 %v81, 4294901760
    %117 = vmatpush1.msra.mxu0 %v116
    %118 = vmatprep.subr.mxu0 0.0
    %v119 = vand.u32 %v82, 4294901760
    %120 = vmatpush1.msra.mxu0 %v119
    %121 = vmatprep.subr.mxu0 0.0
    %v122 = vand.u32 %v83, 4294901760
    %123 = vmatpush1.msra.mxu0 %v122
    %124 = vmatprep.subr.mxu0 0.0
    %v125 = vand.u32 %v84, 4294901760
    %126 = vmatpush1.msra.mxu0 %v125
    %127 = vmatprep.subr.mxu0 0.0
    %v128 = vand.u32 %v85, 4294901760
    %129 = vmatpush1.msra.mxu0 %v128
    %130 = vmatprep.subr.mxu0 0.0
    %v131 = vand.u32 %v86, 4294901760
    %132 = vmatpush1.msra.mxu0 %v131
    %133 = vmatprep.subr.mxu0 0.0
    %v134 = vand.u32 %v87, 4294901760
    %135 = vmatpush1.msra.mxu0 %v134
    %136 = vmatprep.subr.mxu0 0.0
    %137 = vmatpush1.msra.mxu0 0.0
    %138 = vmatprep.subr.mxu0 0.0
    %139 = vmatpush1.msra.mxu0 0.0
    %140 = vmatprep.subr.mxu0 0.0
    %141 = vmatpush1.msra.mxu0 0.0
    %142 = vmatprep.subr.mxu0 0.0
    %143 = vmatpush1.msra.mxu0 0.0
    %144 = vmatprep.subr.mxu0 0.0
    %145 = vmatpush1.msra.mxu0 0.0
    %146 = vmatprep.subr.mxu0 0.0
    %147 = vmatpush1.msra.mxu0 0.0
    %148 = vmatprep.subr.mxu0 0.0
    %149 = vmatpush1.msra.mxu0 0.0
    %150 = vmatprep.subr.mxu0 0.0
    %151 = vmatpush1.msra.mxu0 0.0
    %152 = vmatprep.subr.mxu0 0.0
    %153 = vmatpush1.msra.mxu0 0.0
    %154 = vmatprep.subr.mxu0 0.0
    %155 = vmatpush1.msra.mxu0 0.0
    %156 = vmatprep.subr.mxu0 0.0
    %157 = vmatpush1.msra.mxu0 0.0
    %158 = vmatprep.subr.mxu0 0.0
    %159 = vmatpush1.msra.mxu0 0.0
    %160 = vmatprep.subr.mxu0 0.0
    %161 = vmatpush1.msra.mxu0 0.0
    %162 = vmatprep.subr.mxu0 0.0
    %163 = vmatpush1.msra.mxu0 0.0
    %164 = vmatprep.subr.mxu0 0.0
    %165 = vmatpush1.msra.mxu0 0.0
    %166 = vmatprep.subr.mxu0 0.0
    %167 = vmatpush1.msra.mxu0 0.0
    %168 = vmatprep.mubr.f32.mxu0 0.0
    %v169 = vand.u32 %v71, 4294901760
    %v170 = vsub.f32 %v71, %v169
    %v171 = vand.u32 %v170, 4294901760
    %v172 = vsub.f32 %v170, %v171
    %v173 = vand.u32 %v172, 4294901760
    %174 = vmatmul.mubr.f32.gmra.mrb[0].mxu0 %v173
    %v175 = vpop.f32.mrb[0].mxu0
    %v176 = vadd.f32 0.0, %v175
    %v177 = vpop.f32.mrb[0].mxu0
    %178 = vdwg.mxu0
    %179 = vmatprep.subr.mxu0 0.0
    %v180 = vand.u32 %v72, 4294901760
    %v181 = vsub.f32 %v72, %v180
    %v182 = vand.u32 %v181, 4294901760
    %v183 = vsub.f32 %v181, %v182
    %v184 = vand.u32 %v183, 4294901760
    %185 = vmatpush1.msra.mxu0 %v184
    %186 = vmatprep.subr.mxu0 0.0
    %v187 = vand.u32 %v73, 4294901760
    %v188 = vsub.f32 %v73, %v187
    %v189 = vand.u32 %v188, 4294901760
    %v190 = vsub.f32 %v188, %v189
    %v191 = vand.u32 %v190, 4294901760
    %192 = vmatpush1.msra.mxu0 %v191
    %193 = vmatprep.subr.mxu0 0.0
    %v194 = vand.u32 %v74, 4294901760
    %v195 = vsub.f32 %v74, %v194
    %v196 = vand.u32 %v195, 4294901760
    %v197 = vsub.f32 %v195, %v196
    %v198 = vand.u32 %v197, 4294901760
    %199 = vmatpush1.msra.mxu0 %v198
    %200 = vmatprep.subr.mxu0 0.0
    %v201 = vand.u32 %v75, 4294901760
    %v202 = vsub.f32 %v75, %v201
    %v203 = vand.u32 %v202, 4294901760
    %v204 = vsub.f32 %v202, %v203
    %v205 = vand.u32 %v204, 4294901760
    %206 = vmatpush1.msra.mxu0 %v205
    %207 = vmatprep.subr.mxu0 0.0
    %v208 = vand.u32 %v76, 4294901760
    %v209 = vsub.f32 %v76, %v208
    %v210 = vand.u32 %v209, 4294901760
    %v211 = vsub.f32 %v209, %v210
    %v212 = vand.u32 %v211, 4294901760
    %213 = vmatpush1.msra.mxu0 %v212
    %214 = vmatprep.subr.mxu0 0.0
    %v215 = vand.u32 %v77, 4294901760
    %v216 = vsub.f32 %v77, %v215
    %v217 = vand.u32 %v216, 4294901760
    %v218 = vsub.f32 %v216, %v217
    %v219 = vand.u32 %v218, 4294901760
    %220 = vmatpush1.msra.mxu0 %v219
    %221 = vmatprep.subr.mxu0 0.0
    %v222 = vand.u32 %v78, 4294901760
    %v223 = vsub.f32 %v78, %v222
    %v224 = vand.u32 %v223, 4294901760
    %v225 = vsub.f32 %v223, %v224
    %v226 = vand.u32 %v225, 4294901760
    %227 = vmatpush1.msra.mxu0 %v226
    %228 = vmatprep.subr.mxu0 0.0
    %v229 = vand.u32 %v79, 4294901760
    %v230 = vsub.f32 %v79, %v229
    %v231 = vand.u32 %v230, 4294901760
    %v232 = vsub.f32 %v230, %v231
    %v233 = vand.u32 %v232, 4294901760
    %234 = vmatpush1.msra.mxu0 %v233
    %235 = vmatprep.subr.mxu0 0.0
    %v236 = vand.u32 %v80, 4294901760
    %v237 = vsub.f32 %v80, %v236
    %v238 = vand.u32 %v237, 4294901760
    %v239 = vsub.f32 %v237, %v238
    %v240 = vand.u32 %v239, 4294901760
    %241 = vmatpush1.msra.mxu0 %v240
    %242 = vmatprep.subr.mxu0 0.0
    %v243 = vand.u32 %v81, 4294901760
    %v244 = vsub.f32 %v81, %v243
    %v245 = vand.u32 %v244, 4294901760
    %v246 = vsub.f32 %v244, %v245
    %v247 = vand.u32 %v246, 4294901760
    %248 = vmatpush1.msra.mxu0 %v247
    %249 = vmatprep.subr.mxu0 0.0
    %v250 = vand.u32 %v82, 4294901760
    %v251 = vsub.f32 %v82, %v250
    %v252 = vand.u32 %v251, 4294901760
    %v253 = vsub.f32 %v251, %v252
    %v254 = vand.u32 %v253, 4294901760
    %255 = vmatpush1.msra.mxu0 %v254
    %256 = vmatprep.subr.mxu0 0.0
    %v257 = vand.u32 %v83, 4294901760
    %v258 = vsub.f32 %v83, %v257
    %v259 = vand.u32 %v258, 4294901760
    %v260 = vsub.f32 %v258, %v259
    %v261 = vand.u32 %v260, 4294901760
    %262 = vmatpush1.msra.mxu0 %v261
    %263 = vmatprep.subr.mxu0 0.0
    %v264 = vand.u32 %v84, 4294901760
    %v265 = vsub.f32 %v84, %v264
    %v266 = vand.u32 %v265, 4294901760
    %v267 = vsub.f32 %v265, %v266
    %v268 = vand.u32 %v267, 4294901760
    %269 = vmatpush1.msra.mxu0 %v268
    %270 = vmatprep.subr.mxu0 0.0
    %v271 = vand.u32 %v85, 4294901760
    %v272 = vsub.f32 %v85, %v271
    %v273 = vand.u32 %v272, 4294901760
    %v274 = vsub.f32 %v272, %v273
    %v275 = vand.u32 %v274, 4294901760
    %276 = vmatpush1.msra.mxu0 %v275
    %277 = vmatprep.subr.mxu0 0.0
    %v278 = vand.u32 %v86, 4294901760
    %v279 = vsub.f32 %v86, %v278
    %v280 = vand.u32 %v279, 4294901760
    %v281 = vsub.f32 %v279, %v280
    %v282 = vand.u32 %v281, 4294901760
    %283 = vmatpush1.msra.mxu0 %v282
    %284 = vmatprep.subr.mxu0 0.0
    %v285 = vand.u32 %v87, 4294901760
    %v286 = vsub.f32 %v87, %v285
    %v287 = vand.u32 %v286, 4294901760
    %v288 = vsub.f32 %v286, %v287
    %v289 = vand.u32 %v288, 4294901760
    %290 = vmatpush1.msra.mxu0 %v289
    %291 = vmatprep.subr.mxu0 0.0
    %292 = vmatpush1.msra.mxu0 0.0
    %293 = vmatprep.subr.mxu0 0.0
    %294 = vmatpush1.msra.mxu0 0.0
    %295 = vmatprep.subr.mxu0 0.0
    %296 = vmatpush1.msra.mxu0 0.0
    %297 = vmatprep.subr.mxu0 0.0
    %298 = vmatpush1.msra.mxu0 0.0
    %299 = vmatprep.subr.mxu0 0.0
    %300 = vmatpush1.msra.mxu0 0.0
    %301 = vmatprep.subr.mxu0 0.0
    %302 = vmatpush1.msra.mxu0 0.0
    %303 = vmatprep.subr.mxu0 0.0
    %304 = vmatpush1.msra.mxu0 0.0
    %305 = vmatprep.subr.mxu0 0.0
    %306 = vmatpush1.msra.mxu0 0.0
    %307 = vmatprep.subr.mxu0 0.0
    %308 = vmatpush1.msra.mxu0 0.0
    %309 = vmatprep.subr.mxu0 0.0
    %310 = vmatpush1.msra.mxu0 0.0
    %311 = vmatprep.subr.mxu0 0.0
    %312 = vmatpush1.msra.mxu0 0.0
    %313 = vmatprep.subr.mxu0 0.0
    %314 = vmatpush1.msra.mxu0 0.0
    %315 = vmatprep.subr.mxu0 0.0
    %316 = vmatpush1.msra.mxu0 0.0
    %317 = vmatprep.subr.mxu0 0.0
    %318 = vmatpush1.msra.mxu0 0.0
    %319 = vmatprep.subr.mxu0 0.0
    %320 = vmatpush1.msra.mxu0 0.0
    %321 = vmatprep.subr.mxu0 0.0
    %322 = vmatpush1.msra.mxu0 0.0
    %323 = vmatprep.mubr.f32.mxu0 0.0
    %v324 = vand.u32 %v71, 4294901760
    %325 = vmatmul.mubr.f32.gmra.mrb[0].mxu0 %v324
    %v326 = vpop.f32.mrb[0].mxu0
    %v327 = vadd.f32 %v176, %v326
    %v328 = vpop.f32.mrb[0].mxu0
    %329 = vdwg.mxu0
    %330 = vmatprep.subr.mxu0 0.0
    %v331 = vand.u32 %v72, 4294901760
    %v332 = vsub.f32 %v72, %v331
    %333 = vmatpush1.msra.mxu0 %v332
    %334 = vmatprep.subr.mxu0 0.0
    %v335 = vand.u32 %v73, 4294901760
    %v336 = vsub.f32 %v73, %v335
    %337 = vmatpush1.msra.mxu0 %v336
    %338 = vmatprep.subr.mxu0 0.0
    %v339 = vand.u32 %v74, 4294901760
    %v340 = vsub.f32 %v74, %v339
    %341 = vmatpush1.msra.mxu0 %v340
    %342 = vmatprep.subr.mxu0 0.0
    %v343 = vand.u32 %v75, 4294901760
    %v344 = vsub.f32 %v75, %v343
    %345 = vmatpush1.msra.mxu0 %v344
    %346 = vmatprep.subr.mxu0 0.0
    %v347 = vand.u32 %v76, 4294901760
    %v348 = vsub.f32 %v76, %v347
    %349 = vmatpush1.msra.mxu0 %v348
    %350 = vmatprep.subr.mxu0 0.0
    %v351 = vand.u32 %v77, 4294901760
    %v352 = vsub.f32 %v77, %v351
    %353 = vmatpush1.msra.mxu0 %v352
    %354 = vmatprep.subr.mxu0 0.0
    %v355 = vand.u32 %v78, 4294901760
    %v356 = vsub.f32 %v78, %v355
    %357 = vmatpush1.msra.mxu0 %v356
    %358 = vmatprep.subr.mxu0 0.0
    %v359 = vand.u32 %v79, 4294901760
    %v360 = vsub.f32 %v79, %v359
    %361 = vmatpush1.msra.mxu0 %v360
    %362 = vmatprep.subr.mxu0 0.0
    %v363 = vand.u32 %v80, 4294901760
    %v364 = vsub.f32 %v80, %v363
    %365 = vmatpush1.msra.mxu0 %v364
    %366 = vmatprep.subr.mxu0 0.0
    %v367 = vand.u32 %v81, 4294901760
    %v368 = vsub.f32 %v81, %v367
    %369 = vmatpush1.msra.mxu0 %v368
    %370 = vmatprep.subr.mxu0 0.0
    %v371 = vand.u32 %v82, 4294901760
    %v372 = vsub.f32 %v82, %v371
    %373 = vmatpush1.msra.mxu0 %v372
    %374 = vmatprep.subr.mxu0 0.0
    %v375 = vand.u32 %v83, 4294901760
    %v376 = vsub.f32 %v83, %v375
    %377 = vmatpush1.msra.mxu0 %v376
    %378 = vmatprep.subr.mxu0 0.0
    %v379 = vand.u32 %v84, 4294901760
    %v380 = vsub.f32 %v84, %v379
    %381 = vmatpush1.msra.mxu0 %v380
    %382 = vmatprep.subr.mxu0 0.0
    %v383 = vand.u32 %v85, 4294901760
    %v384 = vsub.f32 %v85, %v383
    %385 = vmatpush1.msra.mxu0 %v384
    %386 = vmatprep.subr.mxu0 0.0
    %v387 = vand.u32 %v86, 4294901760
    %v388 = vsub.f32 %v86, %v387
    %389 = vmatpush1.msra.mxu0 %v388
    %390 = vmatprep.subr.mxu0 0.0
    %v391 = vand.u32 %v87, 4294901760
    %v392 = vsub.f32 %v87, %v391
    %393 = vmatpush1.msra.mxu0 %v392
    %394 = vmatprep.subr.mxu0 0.0
    %395 = vmatpush1.msra.mxu0 0.0
    %396 = vmatprep.subr.mxu0 0.0
    %397 = vmatpush1.msra.mxu0 0.0
    %398 = vmatprep.subr.mxu0 0.0
    %399 = vmatpush1.msra.mxu0 0.0
    %400 = vmatprep.subr.mxu0 0.0
    %401 = vmatpush1.msra.mxu0 0.0
    %402 = vmatprep.subr.mxu0 0.0
    %403 = vmatpush1.msra.mxu0 0.0
    %404 = vmatprep.subr.mxu0 0.0
    %405 = vmatpush1.msra.mxu0 0.0
    %406 = vmatprep.subr.mxu0 0.0
    %407 = vmatpush1.msra.mxu0 0.0
    %408 = vmatprep.subr.mxu0 0.0
    %409 = vmatpush1.msra.mxu0 0.0
    %410 = vmatprep.subr.mxu0 0.0
    %411 = vmatpush1.msra.mxu0 0.0
    %412 = vmatprep.subr.mxu0 0.0
    %413 = vmatpush1.msra.mxu0 0.0
    %414 = vmatprep.subr.mxu0 0.0
    %415 = vmatpush1.msra.mxu0 0.0
    %416 = vmatprep.subr.mxu0 0.0
    %417 = vmatpush1.msra.mxu0 0.0
    %418 = vmatprep.subr.mxu0 0.0
    %419 = vmatpush1.msra.mxu0 0.0
    %420 = vmatprep.subr.mxu0 0.0
    %421 = vmatpush1.msra.mxu0 0.0
    %422 = vmatprep.subr.mxu0 0.0
    %423 = vmatpush1.msra.mxu0 0.0
    %424 = vmatprep.subr.mxu0 0.0
    %425 = vmatpush1.msra.mxu0 0.0
    %426 = vmatprep.mubr.f32.mxu0 0.0
    %v427 = vand.u32 %v71, 4294901760
    %v428 = vsub.f32 %v71, %v427
    %429 = vmatmul.mubr.f32.gmra.mrb[0].mxu0 %v428
    %v430 = vpop.f32.mrb[0].mxu0
    %v431 = vadd.f32 %v327, %v430
    %v432 = vpop.f32.mrb[0].mxu0
    %433 = vdwg.mxu0
    %434 = vmatprep.subr.mxu0 0.0
    %v435 = vand.u32 %v72, 4294901760
    %436 = vmatpush1.msra.mxu0 %v435
    %437 = vmatprep.subr.mxu0 0.0
    %v438 = vand.u32 %v73, 4294901760
    %439 = vmatpush1.msra.mxu0 %v438
    %440 = vmatprep.subr.mxu0 0.0
    %v441 = vand.u32 %v74, 4294901760
    %442 = vmatpush1.msra.mxu0 %v441
    %443 = vmatprep.subr.mxu0 0.0
    %v444 = vand.u32 %v75, 4294901760
    %445 = vmatpush1.msra.mxu0 %v444
    %446 = vmatprep.subr.mxu0 0.0
    %v447 = vand.u32 %v76, 4294901760
    %448 = vmatpush1.msra.mxu0 %v447
    %449 = vmatprep.subr.mxu0 0.0
    %v450 = vand.u32 %v77, 4294901760
    %451 = vmatpush1.msra.mxu0 %v450
    %452 = vmatprep.subr.mxu0 0.0
    %v453 = vand.u32 %v78, 4294901760
    %454 = vmatpush1.msra.mxu0 %v453
    %455 = vmatprep.subr.mxu0 0.0
    %v456 = vand.u32 %v79, 4294901760
    %457 = vmatpush1.msra.mxu0 %v456
    %458 = vmatprep.subr.mxu0 0.0
    %v459 = vand.u32 %v80, 4294901760
    %460 = vmatpush1.msra.mxu0 %v459
    %461 = vmatprep.subr.mxu0 0.0
    %v462 = vand.u32 %v81, 4294901760
    %463 = vmatpush1.msra.mxu0 %v462
    %464 = vmatprep.subr.mxu0 0.0
    %v465 = vand.u32 %v82, 4294901760
    %466 = vmatpush1.msra.mxu0 %v465
    %467 = vmatprep.subr.mxu0 0.0
    %v468 = vand.u32 %v83, 4294901760
    %469 = vmatpush1.msra.mxu0 %v468
    %470 = vmatprep.subr.mxu0 0.0
    %v471 = vand.u32 %v84, 4294901760
    %472 = vmatpush1.msra.mxu0 %v471
    %473 = vmatprep.subr.mxu0 0.0
    %v474 = vand.u32 %v85, 4294901760
    %475 = vmatpush1.msra.mxu0 %v474
    %476 = vmatprep.subr.mxu0 0.0
    %v477 = vand.u32 %v86, 4294901760
    %478 = vmatpush1.msra.mxu0 %v477
    %479 = vmatprep.subr.mxu0 0.0
    %v480 = vand.u32 %v87, 4294901760
    %481 = vmatpush1.msra.mxu0 %v480
    %482 = vmatprep.subr.mxu0 0.0
    %483 = vmatpush1.msra.mxu0 0.0
    %484 = vmatprep.subr.mxu0 0.0
    %485 = vmatpush1.msra.mxu0 0.0
    %486 = vmatprep.subr.mxu0 0.0
    %487 = vmatpush1.msra.mxu0 0.0
    %488 = vmatprep.subr.mxu0 0.0
    %489 = vmatpush1.msra.mxu0 0.0
    %490 = vmatprep.subr.mxu0 0.0
    %491 = vmatpush1.msra.mxu0 0.0
    %492 = vmatprep.subr.mxu0 0.0
    %493 = vmatpush1.msra.mxu0 0.0
    %494 = vmatprep.subr.mxu0 0.0
    %495 = vmatpush1.msra.mxu0 0.0
    %496 = vmatprep.subr.mxu0 0.0
    %497 = vmatpush1.msra.mxu0 0.0
    %498 = vmatprep.subr.mxu0 0.0
    %499 = vmatpush1.msra.mxu0 0.0
    %500 = vmatprep.subr.mxu0 0.0
    %501 = vmatpush1.msra.mxu0 0.0
    %502 = vmatprep.subr.mxu0 0.0
    %503 = vmatpush1.msra.mxu0 0.0
    %504 = vmatprep.subr.mxu0 0.0
    %505 = vmatpush1.msra.mxu0 0.0
    %506 = vmatprep.subr.mxu0 0.0
    %507 = vmatpush1.msra.mxu0 0.0
    %508 = vmatprep.subr.mxu0 0.0
    %509 = vmatpush1.msra.mxu0 0.0
    %510 = vmatprep.subr.mxu0 0.0
    %511 = vmatpush1.msra.mxu0 0.0
    %512 = vmatprep.subr.mxu0 0.0
    %513 = vmatpush1.msra.mxu0 0.0
    %514 = vmatprep.mubr.f32.mxu0 0.0
    %v515 = vand.u32 %v71, 4294901760
    %v516 = vsub.f32 %v71, %v515
    %v517 = vand.u32 %v516, 4294901760
    %518 = vmatmul.mubr.f32.gmra.mrb[0].mxu0 %v517
    %v519 = vpop.f32.mrb[0].mxu0
    %v520 = vadd.f32 %v431, %v519
    %v521 = vpop.f32.mrb[0].mxu0
    %522 = vdwg.mxu0
    %523 = vmatprep.subr.mxu0 0.0
    %v524 = vand.u32 %v72, 4294901760
    %v525 = vsub.f32 %v72, %v524
    %v526 = vand.u32 %v525, 4294901760
    %527 = vmatpush1.msra.mxu0 %v526
    %528 = vmatprep.subr.mxu0 0.0
    %v529 = vand.u32 %v73, 4294901760
    %v530 = vsub.f32 %v73, %v529
    %v531 = vand.u32 %v530, 4294901760
    %532 = vmatpush1.msra.mxu0 %v531
    %533 = vmatprep.subr.mxu0 0.0
    %v534 = vand.u32 %v74, 4294901760
    %v535 = vsub.f32 %v74, %v534
    %v536 = vand.u32 %v535, 4294901760
    %537 = vmatpush1.msra.mxu0 %v536
    %538 = vmatprep.subr.mxu0 0.0
    %v539 = vand.u32 %v75, 4294901760
    %v540 = vsub.f32 %v75, %v539
    %v541 = vand.u32 %v540, 4294901760
    %542 = vmatpush1.msra.mxu0 %v541
    %543 = vmatprep.subr.mxu0 0.0
    %v544 = vand.u32 %v76, 4294901760
    %v545 = vsub.f32 %v76, %v544
    %v546 = vand.u32 %v545, 4294901760
    %547 = vmatpush1.msra.mxu0 %v546
    %548 = vmatprep.subr.mxu0 0.0
    %v549 = vand.u32 %v77, 4294901760
    %v550 = vsub.f32 %v77, %v549
    %v551 = vand.u32 %v550, 4294901760
    %552 = vmatpush1.msra.mxu0 %v551
    %553 = vmatprep.subr.mxu0 0.0
    %v554 = vand.u32 %v78, 4294901760
    %v555 = vsub.f32 %v78, %v554
    %v556 = vand.u32 %v555, 4294901760
    %557 = vmatpush1.msra.mxu0 %v556
    %558 = vmatprep.subr.mxu0 0.0
    %v559 = vand.u32 %v79, 4294901760
    %v560 = vsub.f32 %v79, %v559
    %v561 = vand.u32 %v560, 4294901760
    %562 = vmatpush1.msra.mxu0 %v561
    %563 = vmatprep.subr.mxu0 0.0
    %v564 = vand.u32 %v80, 4294901760
    %v565 = vsub.f32 %v80, %v564
    %v566 = vand.u32 %v565, 4294901760
    %567 = vmatpush1.msra.mxu0 %v566
    %568 = vmatprep.subr.mxu0 0.0
    %v569 = vand.u32 %v81, 4294901760
    %v570 = vsub.f32 %v81, %v569
    %v571 = vand.u32 %v570, 4294901760
    %572 = vmatpush1.msra.mxu0 %v571
    %573 = vmatprep.subr.mxu0 0.0
    %v574 = vand.u32 %v82, 4294901760
    %v575 = vsub.f32 %v82, %v574
    %v576 = vand.u32 %v575, 4294901760
    %577 = vmatpush1.msra.mxu0 %v576
    %578 = vmatprep.subr.mxu0 0.0
    %v579 = vand.u32 %v83, 4294901760
    %v580 = vsub.f32 %v83, %v579
    %v581 = vand.u32 %v580, 4294901760
    %582 = vmatpush1.msra.mxu0 %v581
    %583 = vmatprep.subr.mxu0 0.0
    %v584 = vand.u32 %v84, 4294901760
    %v585 = vsub.f32 %v84, %v584
    %v586 = vand.u32 %v585, 4294901760
    %587 = vmatpush1.msra.mxu0 %v586
    %588 = vmatprep.subr.mxu0 0.0
    %v589 = vand.u32 %v85, 4294901760
    %v590 = vsub.f32 %v85, %v589
    %v591 = vand.u32 %v590, 4294901760
    %592 = vmatpush1.msra.mxu0 %v591
    %593 = vmatprep.subr.mxu0 0.0
    %v594 = vand.u32 %v86, 4294901760
    %v595 = vsub.f32 %v86, %v594
    %v596 = vand.u32 %v595, 4294901760
    %597 = vmatpush1.msra.mxu0 %v596
    %598 = vmatprep.subr.mxu0 0.0
    %v599 = vand.u32 %v87, 4294901760
    %v600 = vsub.f32 %v87, %v599
    %v601 = vand.u32 %v600, 4294901760
    %602 = vmatpush1.msra.mxu0 %v601
    %603 = vmatprep.subr.mxu0 0.0
    %604 = vmatpush1.msra.mxu0 0.0
    %605 = vmatprep.subr.mxu0 0.0
    %606 = vmatpush1.msra.mxu0 0.0
    %607 = vmatprep.subr.mxu0 0.0
    %608 = vmatpush1.msra.mxu0 0.0
    %609 = vmatprep.subr.mxu0 0.0
    %610 = vmatpush1.msra.mxu0 0.0
    %611 = vmatprep.subr.mxu0 0.0
    %612 = vmatpush1.msra.mxu0 0.0
    %613 = vmatprep.subr.mxu0 0.0
    %614 = vmatpush1.msra.mxu0 0.0
    %615 = vmatprep.subr.mxu0 0.0
    %616 = vmatpush1.msra.mxu0 0.0
    %617 = vmatprep.subr.mxu0 0.0
    %618 = vmatpush1.msra.mxu0 0.0
    %619 = vmatprep.subr.mxu0 0.0
    %620 = vmatpush1.msra.mxu0 0.0
    %621 = vmatprep.subr.mxu0 0.0
    %622 = vmatpush1.msra.mxu0 0.0
    %623 = vmatprep.subr.mxu0 0.0
    %624 = vmatpush1.msra.mxu0 0.0
    %625 = vmatprep.subr.mxu0 0.0
    %626 = vmatpush1.msra.mxu0 0.0
    %627 = vmatprep.subr.mxu0 0.0
    %628 = vmatpush1.msra.mxu0 0.0
    %629 = vmatprep.subr.mxu0 0.0
    %630 = vmatpush1.msra.mxu0 0.0
    %631 = vmatprep.subr.mxu0 0.0
    %632 = vmatpush1.msra.mxu0 0.0
    %633 = vmatprep.subr.mxu0 0.0
    %634 = vmatpush1.msra.mxu0 0.0
    %635 = vmatprep.mubr.f32.mxu0 0.0
    %v636 = vand.u32 %v71, 4294901760
    %637 = vmatmul.mubr.f32.gmra.mrb[0].mxu0 %v636
    %v638 = vpop.f32.mrb[0].mxu0
    %v639 = vadd.f32 %v520, %v638
    %v640 = vpop.f32.mrb[0].mxu0
    %641 = vdwg.mxu0
    %642 = vmatprep.subr.mxu0 0.0
    %v643 = vand.u32 %v72, 4294901760
    %644 = vmatpush1.msra.mxu0 %v643
    %645 = vmatprep.subr.mxu0 0.0
    %v646 = vand.u32 %v73, 4294901760
    %647 = vmatpush1.msra.mxu0 %v646
    %648 = vmatprep.subr.mxu0 0.0
    %v649 = vand.u32 %v74, 4294901760
    %650 = vmatpush1.msra.mxu0 %v649
    %651 = vmatprep.subr.mxu0 0.0
    %v652 = vand.u32 %v75, 4294901760
    %653 = vmatpush1.msra.mxu0 %v652
    %654 = vmatprep.subr.mxu0 0.0
    %v655 = vand.u32 %v76, 4294901760
    %656 = vmatpush1.msra.mxu0 %v655
    %657 = vmatprep.subr.mxu0 0.0
    %v658 = vand.u32 %v77, 4294901760
    %659 = vmatpush1.msra.mxu0 %v658
    %660 = vmatprep.subr.mxu0 0.0
    %v661 = vand.u32 %v78, 4294901760
    %662 = vmatpush1.msra.mxu0 %v661
    %663 = vmatprep.subr.mxu0 0.0
    %v664 = vand.u32 %v79, 4294901760
    %665 = vmatpush1.msra.mxu0 %v664
    %666 = vmatprep.subr.mxu0 0.0
    %v667 = vand.u32 %v80, 4294901760
    %668 = vmatpush1.msra.mxu0 %v667
    %669 = vmatprep.subr.mxu0 0.0
    %v670 = vand.u32 %v81, 4294901760
    %671 = vmatpush1.msra.mxu0 %v670
    %672 = vmatprep.subr.mxu0 0.0
    %v673 = vand.u32 %v82, 4294901760
    %674 = vmatpush1.msra.mxu0 %v673
    %675 = vmatprep.subr.mxu0 0.0
    %v676 = vand.u32 %v83, 4294901760
    %677 = vmatpush1.msra.mxu0 %v676
    %678 = vmatprep.subr.mxu0 0.0
    %v679 = vand.u32 %v84, 4294901760
    %680 = vmatpush1.msra.mxu0 %v679
    %681 = vmatprep.subr.mxu0 0.0
    %v682 = vand.u32 %v85, 4294901760
    %683 = vmatpush1.msra.mxu0 %v682
    %684 = vmatprep.subr.mxu0 0.0
    %v685 = vand.u32 %v86, 4294901760
    %686 = vmatpush1.msra.mxu0 %v685
    %687 = vmatprep.subr.mxu0 0.0
    %v688 = vand.u32 %v87, 4294901760
    %689 = vmatpush1.msra.mxu0 %v688
    %690 = vmatprep.subr.mxu0 0.0
    %691 = vmatpush1.msra.mxu0 0.0
    %692 = vmatprep.subr.mxu0 0.0
    %693 = vmatpush1.msra.mxu0 0.0
    %694 = vmatprep.subr.mxu0 0.0
    %695 = vmatpush1.msra.mxu0 0.0
    %696 = vmatprep.subr.mxu0 0.0
    %697 = vmatpush1.msra.mxu0 0.0
    %698 = vmatprep.subr.mxu0 0.0
    %699 = vmatpush1.msra.mxu0 0.0
    %700 = vmatprep.subr.mxu0 0.0
    %701 = vmatpush1.msra.mxu0 0.0
    %702 = vmatprep.subr.mxu0 0.0
    %703 = vmatpush1.msra.mxu0 0.0
    %704 = vmatprep.subr.mxu0 0.0
    %705 = vmatpush1.msra.mxu0 0.0
    %706 = vmatprep.subr.mxu0 0.0
    %707 = vmatpush1.msra.mxu0 0.0
    %708 = vmatprep.subr.mxu0 0.0
    %709 = vmatpush1.msra.mxu0 0.0
    %710 = vmatprep.subr.mxu0 0.0
    %711 = vmatpush1.msra.mxu0 0.0
    %712 = vmatprep.subr.mxu0 0.0
    %713 = vmatpush1.msra.mxu0 0.0
    %714 = vmatprep.subr.mxu0 0.0
    %715 = vmatpush1.msra.mxu0 0.0
    %716 = vmatprep.subr.mxu0 0.0
    %717 = vmatpush1.msra.mxu0 0.0
    %718 = vmatprep.subr.mxu0 0.0
    %719 = vmatpush1.msra.mxu0 0.0
    %720 = vmatprep.subr.mxu0 0.0
    %721 = vmatpush1.msra.mxu0 0.0
    %722 = vmatprep.mubr.f32.mxu0 0.0
    %v723 = vand.u32 %v71, 4294901760
    %724 = vmatmul.mubr.f32.gmra.mrb[0].mxu0 %v723
    %v725 = vpop.f32.mrb[0].mxu0
    %v726 = vadd.f32 %v639, %v725
    %v727 = vpop.f32.mrb[0].mxu0
    %728 = vdwg.mxu0
    %vm729 = vcmask 130048
    %v731 = vsel %vm729, %v26, 0
    %733 = vmatprep.subr.mxu0 0.0
    %v734 = vand.u32 %v27, 4294901760
    %735 = vmatpush1.msra.mxu0 %v734
    %736 = vmatprep.subr.mxu0 0.0
    %v737 = vand.u32 %v28, 4294901760
    %738 = vmatpush1.msra.mxu0 %v737
    %739 = vmatprep.subr.mxu0 0.0
    %740 = vmatpush1.msra.mxu0 0.0
    %741 = vmatprep.subr.mxu0 0.0
    %742 = vmatpush1.msra.mxu0 0.0
    %743 = vmatprep.subr.mxu0 0.0
    %744 = vmatpush1.msra.mxu0 0.0
    %745 = vmatprep.subr.mxu0 0.0
    %746 = vmatpush1.msra.mxu0 0.0
    %747 = vmatprep.subr.mxu0 0.0
    %748 = vmatpush1.msra.mxu0 0.0
    %749 = vmatprep.subr.mxu0 0.0
    %750 = vmatpush1.msra.mxu0 0.0
    %751 = vmatprep.subr.mxu0 0.0
    %752 = vmatpush1.msra.mxu0 0.0
    %753 = vmatprep.subr.mxu0 0.0
    %754 = vmatpush1.msra.mxu0 0.0
    %755 = vmatprep.subr.mxu0 0.0
    %756 = vmatpush1.msra.mxu0 0.0
    %757 = vmatprep.subr.mxu0 0.0
    %758 = vmatpush1.msra.mxu0 0.0
    %759 = vmatprep.subr.mxu0 0.0
    %760 = vmatpush1.msra.mxu0 0.0
    %761 = vmatprep.subr.mxu0 0.0
    %762 = vmatpush1.msra.mxu0 0.0
    %763 = vmatprep.subr.mxu0 0.0
    %764 = vmatpush1.msra.mxu0 0.0
    %765 = vmatprep.subr.mxu0 0.0
    %766 = vmatpush1.msra.mxu0 0.0
    %767 = vmatprep.subr.mxu0 0.0
    %768 = vmatpush1.msra.mxu0 0.0
    %769 = vmatprep.subr.mxu0 0.0
    %770 = vmatpush1.msra.mxu0 0.0
    %771 = vmatprep.subr.mxu0 0.0
    %772 = vmatpush1.msra.mxu0 0.0
    %773 = vmatprep.subr.mxu0 0.0
    %774 = vmatpush1.msra.mxu0 0.0
    %775 = vmatprep.subr.mxu0 0.0
    %776 = vmatpush1.msra.mxu0 0.0
    %777 = vmatprep.subr.mxu0 0.0
    %778 = vmatpush1.msra.mxu0 0.0
    %779 = vmatprep.subr.mxu0 0.0
    %780 = vmatpush1.msra.mxu0 0.0
    %781 = vmatprep.subr.mxu0 0.0
    %782 = vmatpush1.msra.mxu0 0.0
    %783 = vmatprep.subr.mxu0 0.0
    %784 = vmatpush1.msra.mxu0 0.0
    %785 = vmatprep.subr.mxu0 0.0
    %786 = vmatpush1.msra.mxu0 0.0
    %787 = vmatprep.subr.mxu0 0.0
    %788 = vmatpush1.msra.mxu0 0.0
    %789 = vmatprep.subr.mxu0 0.0
    %790 = vmatpush1.msra.mxu0 0.0
    %791 = vmatprep.subr.mxu0 0.0
    %792 = vmatpush1.msra.mxu0 0.0
    %793 = vmatprep.subr.mxu0 0.0
    %794 = vmatpush1.msra.mxu0 0.0
    %795 = vmatprep.subr.mxu0 0.0
    %796 = vmatpush1.msra.mxu0 0.0
    %797 = vmatprep.subr.mxu0 0.0
    %798 = vmatpush1.msra.mxu0 0.0
    %799 = vmatprep.mubr.f32.mxu0 0.0
    %v800 = vand.u32 %v731, 4294901760
    %v801 = vsub.f32 %v731, %v800
    %v802 = vand.u32 %v801, 4294901760
    %v803 = vsub.f32 %v801, %v802
    %v804 = vand.u32 %v803, 4294901760
    %805 = vmatmul.mubr.f32.gmra.mrb[0].mxu0 %v804
    %v806 = vpop.f32.mrb[0].mxu0
    %v807 = vadd.f32 %v726, %v806
    %v808 = vpop.f32.mrb[0].mxu0
    %809 = vdwg.mxu0
    %810 = vmatprep.subr.mxu0 0.0
    %v811 = vand.u32 %v27, 4294901760
    %v812 = vsub.f32 %v27, %v811
    %v813 = vand.u32 %v812, 4294901760
    %v814 = vsub.f32 %v812, %v813
    %v815 = vand.u32 %v814, 4294901760
    %816 = vmatpush1.msra.mxu0 %v815
    %817 = vmatprep.subr.mxu0 0.0
    %v818 = vand.u32 %v28, 4294901760
    %v819 = vsub.f32 %v28, %v818
    %v820 = vand.u32 %v819, 4294901760
    %v821 = vsub.f32 %v819, %v820
    %v822 = vand.u32 %v821, 4294901760
    %823 = vmatpush1.msra.mxu0 %v822
    %824 = vmatprep.subr.mxu0 0.0
    %825 = vmatpush1.msra.mxu0 0.0
    %826 = vmatprep.subr.mxu0 0.0
    %827 = vmatpush1.msra.mxu0 0.0
    %828 = vmatprep.subr.mxu0 0.0
    %829 = vmatpush1.msra.mxu0 0.0
    %830 = vmatprep.subr.mxu0 0.0
    %831 = vmatpush1.msra.mxu0 0.0
    %832 = vmatprep.subr.mxu0 0.0
    %833 = vmatpush1.msra.mxu0 0.0
    %834 = vmatprep.subr.mxu0 0.0
    %835 = vmatpush1.msra.mxu0 0.0
    %836 = vmatprep.subr.mxu0 0.0
    %837 = vmatpush1.msra.mxu0 0.0
    %838 = vmatprep.subr.mxu0 0.0
    %839 = vmatpush1.msra.mxu0 0.0
    %840 = vmatprep.subr.mxu0 0.0
    %841 = vmatpush1.msra.mxu0 0.0
    %842 = vmatprep.subr.mxu0 0.0
    %843 = vmatpush1.msra.mxu0 0.0
    %844 = vmatprep.subr.mxu0 0.0
    %845 = vmatpush1.msra.mxu0 0.0
    %846 = vmatprep.subr.mxu0 0.0
    %847 = vmatpush1.msra.mxu0 0.0
    %848 = vmatprep.subr.mxu0 0.0
    %849 = vmatpush1.msra.mxu0 0.0
    %850 = vmatprep.subr.mxu0 0.0
    %851 = vmatpush1.msra.mxu0 0.0
    %852 = vmatprep.subr.mxu0 0.0
    %853 = vmatpush1.msra.mxu0 0.0
    %854 = vmatprep.subr.mxu0 0.0
    %855 = vmatpush1.msra.mxu0 0.0
    %856 = vmatprep.subr.mxu0 0.0
    %857 = vmatpush1.msra.mxu0 0.0
    %858 = vmatprep.subr.mxu0 0.0
    %859 = vmatpush1.msra.mxu0 0.0
    %860 = vmatprep.subr.mxu0 0.0
    %861 = vmatpush1.msra.mxu0 0.0
    %862 = vmatprep.subr.mxu0 0.0
    %863 = vmatpush1.msra.mxu0 0.0
    %864 = vmatprep.subr.mxu0 0.0
    %865 = vmatpush1.msra.mxu0 0.0
    %866 = vmatprep.subr.mxu0 0.0
    %867 = vmatpush1.msra.mxu0 0.0
    %868 = vmatprep.subr.mxu0 0.0
    %869 = vmatpush1.msra.mxu0 0.0
    %870 = vmatprep.subr.mxu0 0.0
    %871 = vmatpush1.msra.mxu0 0.0
    %872 = vmatprep.subr.mxu0 0.0
    %873 = vmatpush1.msra.mxu0 0.0
    %874 = vmatprep.subr.mxu0 0.0
    %875 = vmatpush1.msra.mxu0 0.0
    %876 = vmatprep.subr.mxu0 0.0
    %877 = vmatpush1.msra.mxu0 0.0
    %878 = vmatprep.subr.mxu0 0.0
    %879 = vmatpush1.msra.mxu0 0.0
    %880 = vmatprep.subr.mxu0 0.0
    %881 = vmatpush1.msra.mxu0 0.0
    %882 = vmatprep.subr.mxu0 0.0
    %883 = vmatpush1.msra.mxu0 0.0
    %884 = vmatprep.mubr.f32.mxu0 0.0
    %v885 = vand.u32 %v731, 4294901760
    %886 = vmatmul.mubr.f32.gmra.mrb[0].mxu0 %v885
    %v887 = vpop.f32.mrb[0].mxu0
    %v888 = vadd.f32 %v807, %v887
    %v889 = vpop.f32.mrb[0].mxu0
    %890 = vdwg.mxu0
    %891 = vmatprep.subr.mxu0 0.0
    %v892 = vand.u32 %v27, 4294901760
    %v893 = vsub.f32 %v27, %v892
    %894 = vmatpush1.msra.mxu0 %v893
    %895 = vmatprep.subr.mxu0 0.0
    %v896 = vand.u32 %v28, 4294901760
    %v897 = vsub.f32 %v28, %v896
    %898 = vmatpush1.msra.mxu0 %v897
    %899 = vmatprep.subr.mxu0 0.0
    %900 = vmatpush1.msra.mxu0 0.0
    %901 = vmatprep.subr.mxu0 0.0
    %902 = vmatpush1.msra.mxu0 0.0
    %903 = vmatprep.subr.mxu0 0.0
    %904 = vmatpush1.msra.mxu0 0.0
    %905 = vmatprep.subr.mxu0 0.0
    %906 = vmatpush1.msra.mxu0 0.0
    %907 = vmatprep.subr.mxu0 0.0
    %908 = vmatpush1.msra.mxu0 0.0
    %909 = vmatprep.subr.mxu0 0.0
    %910 = vmatpush1.msra.mxu0 0.0
    %911 = vmatprep.subr.mxu0 0.0
    %912 = vmatpush1.msra.mxu0 0.0
    %913 = vmatprep.subr.mxu0 0.0
    %914 = vmatpush1.msra.mxu0 0.0
    %915 = vmatprep.subr.mxu0 0.0
    %916 = vmatpush1.msra.mxu0 0.0
    %917 = vmatprep.subr.mxu0 0.0
    %918 = vmatpush1.msra.mxu0 0.0
    %919 = vmatprep.subr.mxu0 0.0
    %920 = vmatpush1.msra.mxu0 0.0
    %921 = vmatprep.subr.mxu0 0.0
    %922 = vmatpush1.msra.mxu0 0.0
    %923 = vmatprep.subr.mxu0 0.0
    %924 = vmatpush1.msra.mxu0 0.0
    %925 = vmatprep.subr.mxu0 0.0
    %926 = vmatpush1.msra.mxu0 0.0
    %927 = vmatprep.subr.mxu0 0.0
    %928 = vmatpush1.msra.mxu0 0.0
    %929 = vmatprep.subr.mxu0 0.0
    %930 = vmatpush1.msra.mxu0 0.0
    %931 = vmatprep.subr.mxu0 0.0
    %932 = vmatpush1.msra.mxu0 0.0
    %933 = vmatprep.subr.mxu0 0.0
    %934 = vmatpush1.msra.mxu0 0.0
    %935 = vmatprep.subr.mxu0 0.0
    %936 = vmatpush1.msra.mxu0 0.0
    %937 = vmatprep.subr.mxu0 0.0
    %938 = vmatpush1.msra.mxu0 0.0
    %939 = vmatprep.subr.mxu0 0.0
    %940 = vmatpush1.msra.mxu0 0.0
    %941 = vmatprep.subr.mxu0 0.0
    %942 = vmatpush1.msra.mxu0 0.0
    %943 = vmatprep.subr.mxu0 0.0
    %944 = vmatpush1.msra.mxu0 0.0
    %945 = vmatprep.subr.mxu0 0.0
    %946 = vmatpush1.msra.mxu0 0.0
    %947 = vmatprep.subr.mxu0 0.0
    %948 = vmatpush1.msra.mxu0 0.0
    %949 = vmatprep.subr.mxu0 0.0
    %950 = vmatpush1.msra.mxu0 0.0
    %951 = vmatprep.subr.mxu0 0.0
    %952 = vmatpush1.msra.mxu0 0.0
    %953 = vmatprep.subr.mxu0 0.0
    %954 = vmatpush1.msra.mxu0 0.0
    %955 = vmatprep.subr.mxu0 0.0
    %956 = vmatpush1.msra.mxu0 0.0
    %957 = vmatprep.subr.mxu0 0.0
    %958 = vmatpush1.msra.mxu0 0.0
    %959 = vmatprep.mubr.f32.mxu0 0.0
    %v960 = vand.u32 %v731, 4294901760
    %v961 = vsub.f32 %v731, %v960
    %962 = vmatmul.mubr.f32.gmra.mrb[0].mxu0 %v961
    %v963 = vpop.f32.mrb[0].mxu0
    %v964 = vadd.f32 %v888, %v963
    %v965 = vpop.f32.mrb[0].mxu0
    %966 = vdwg.mxu0
    %967 = vmatprep.subr.mxu0 0.0
    %v968 = vand.u32 %v27, 4294901760
    %969 = vmatpush1.msra.mxu0 %v968
    %970 = vmatprep.subr.mxu0 0.0
    %v971 = vand.u32 %v28, 4294901760
    %972 = vmatpush1.msra.mxu0 %v971
    %973 = vmatprep.subr.mxu0 0.0
    %974 = vmatpush1.msra.mxu0 0.0
    %975 = vmatprep.subr.mxu0 0.0
    %976 = vmatpush1.msra.mxu0 0.0
    %977 = vmatprep.subr.mxu0 0.0
    %978 = vmatpush1.msra.mxu0 0.0
    %979 = vmatprep.subr.mxu0 0.0
    %980 = vmatpush1.msra.mxu0 0.0
    %981 = vmatprep.subr.mxu0 0.0
    %982 = vmatpush1.msra.mxu0 0.0
    %983 = vmatprep.subr.mxu0 0.0
    %984 = vmatpush1.msra.mxu0 0.0
    %985 = vmatprep.subr.mxu0 0.0
    %986 = vmatpush1.msra.mxu0 0.0
    %987 = vmatprep.subr.mxu0 0.0
    %988 = vmatpush1.msra.mxu0 0.0
    %989 = vmatprep.subr.mxu0 0.0
    %990 = vmatpush1.msra.mxu0 0.0
    %991 = vmatprep.subr.mxu0 0.0
    %992 = vmatpush1.msra.mxu0 0.0
    %993 = vmatprep.subr.mxu0 0.0
    %994 = vmatpush1.msra.mxu0 0.0
    %995 = vmatprep.subr.mxu0 0.0
    %996 = vmatpush1.msra.mxu0 0.0
    %997 = vmatprep.subr.mxu0 0.0
    %998 = vmatpush1.msra.mxu0 0.0
    %999 = vmatprep.subr.mxu0 0.0
    %1000 = vmatpush1.msra.mxu0 0.0
    %1001 = vmatprep.subr.mxu0 0.0
    %1002 = vmatpush1.msra.mxu0 0.0
    %1003 = vmatprep.subr.mxu0 0.0
    %1004 = vmatpush1.msra.mxu0 0.0
    %1005 = vmatprep.subr.mxu0 0.0
    %1006 = vmatpush1.msra.mxu0 0.0
    %1007 = vmatprep.subr.mxu0 0.0
    %1008 = vmatpush1.msra.mxu0 0.0
    %1009 = vmatprep.subr.mxu0 0.0
    %1010 = vmatpush1.msra.mxu0 0.0
    %1011 = vmatprep.subr.mxu0 0.0
    %1012 = vmatpush1.msra.mxu0 0.0
    %1013 = vmatprep.subr.mxu0 0.0
    %1014 = vmatpush1.msra.mxu0 0.0
    %1015 = vmatprep.subr.mxu0 0.0
    %1016 = vmatpush1.msra.mxu0 0.0
    %1017 = vmatprep.subr.mxu0 0.0
    %1018 = vmatpush1.msra.mxu0 0.0
    %1019 = vmatprep.subr.mxu0 0.0
    %1020 = vmatpush1.msra.mxu0 0.0
    %1021 = vmatprep.subr.mxu0 0.0
    %1022 = vmatpush1.msra.mxu0 0.0
    %1023 = vmatprep.subr.mxu0 0.0
    %1024 = vmatpush1.msra.mxu0 0.0
    %1025 = vmatprep.subr.mxu0 0.0
    %1026 = vmatpush1.msra.mxu0 0.0
    %1027 = vmatprep.subr.mxu0 0.0
    %1028 = vmatpush1.msra.mxu0 0.0
    %1029 = vmatprep.subr.mxu0 0.0
    %1030 = vmatpush1.msra.mxu0 0.0
    %1031 = vmatprep.subr.mxu0 0.0
    %1032 = vmatpush1.msra.mxu0 0.0
    %1033 = vmatprep.mubr.f32.mxu0 0.0
    %v1034 = vand.u32 %v731, 4294901760
    %v1035 = vsub.f32 %v731, %v1034
    %v1036 = vand.u32 %v1035, 4294901760
    %1037 = vmatmul.mubr.f32.gmra.mrb[0].mxu0 %v1036
    %v1038 = vpop.f32.mrb[0].mxu0
    %v1039 = vadd.f32 %v964, %v1038
    %v1040 = vpop.f32.mrb[0].mxu0
    %1041 = vdwg.mxu0
    %1042 = vmatprep.subr.mxu0 0.0
    %v1043 = vand.u32 %v27, 4294901760
    %v1044 = vsub.f32 %v27, %v1043
    %v1045 = vand.u32 %v1044, 4294901760
    %1046 = vmatpush1.msra.mxu0 %v1045
    %1047 = vmatprep.subr.mxu0 0.0
    %v1048 = vand.u32 %v28, 4294901760
    %v1049 = vsub.f32 %v28, %v1048
    %v1050 = vand.u32 %v1049, 4294901760
    %1051 = vmatpush1.msra.mxu0 %v1050
    %1052 = vmatprep.subr.mxu0 0.0
    %1053 = vmatpush1.msra.mxu0 0.0
    %1054 = vmatprep.subr.mxu0 0.0
    %1055 = vmatpush1.msra.mxu0 0.0
    %1056 = vmatprep.subr.mxu0 0.0
    %1057 = vmatpush1.msra.mxu0 0.0
    %1058 = vmatprep.subr.mxu0 0.0
    %1059 = vmatpush1.msra.mxu0 0.0
    %1060 = vmatprep.subr.mxu0 0.0
    %1061 = vmatpush1.msra.mxu0 0.0
    %1062 = vmatprep.subr.mxu0 0.0
    %1063 = vmatpush1.msra.mxu0 0.0
    %1064 = vmatprep.subr.mxu0 0.0
    %1065 = vmatpush1.msra.mxu0 0.0
    %1066 = vmatprep.subr.mxu0 0.0
    %1067 = vmatpush1.msra.mxu0 0.0
    %1068 = vmatprep.subr.mxu0 0.0
    %1069 = vmatpush1.msra.mxu0 0.0
    %1070 = vmatprep.subr.mxu0 0.0
    %1071 = vmatpush1.msra.mxu0 0.0
    %1072 = vmatprep.subr.mxu0 0.0
    %1073 = vmatpush1.msra.mxu0 0.0
    %1074 = vmatprep.subr.mxu0 0.0
    %1075 = vmatpush1.msra.mxu0 0.0
    %1076 = vmatprep.subr.mxu0 0.0
    %1077 = vmatpush1.msra.mxu0 0.0
    %1078 = vmatprep.subr.mxu0 0.0
    %1079 = vmatpush1.msra.mxu0 0.0
    %1080 = vmatprep.subr.mxu0 0.0
    %1081 = vmatpush1.msra.mxu0 0.0
    %1082 = vmatprep.subr.mxu0 0.0
    %1083 = vmatpush1.msra.mxu0 0.0
    %1084 = vmatprep.subr.mxu0 0.0
    %1085 = vmatpush1.msra.mxu0 0.0
    %1086 = vmatprep.subr.mxu0 0.0
    %1087 = vmatpush1.msra.mxu0 0.0
    %1088 = vmatprep.subr.mxu0 0.0
    %1089 = vmatpush1.msra.mxu0 0.0
    %1090 = vmatprep.subr.mxu0 0.0
    %1091 = vmatpush1.msra.mxu0 0.0
    %1092 = vmatprep.subr.mxu0 0.0
    %1093 = vmatpush1.msra.mxu0 0.0
    %1094 = vmatprep.subr.mxu0 0.0
    %1095 = vmatpush1.msra.mxu0 0.0
    %1096 = vmatprep.subr.mxu0 0.0
    %1097 = vmatpush1.msra.mxu0 0.0
    %1098 = vmatprep.subr.mxu0 0.0
    %1099 = vmatpush1.msra.mxu0 0.0
    %1100 = vmatprep.subr.mxu0 0.0
    %1101 = vmatpush1.msra.mxu0 0.0
    %1102 = vmatprep.subr.mxu0 0.0
    %1103 = vmatpush1.msra.mxu0 0.0
    %1104 = vmatprep.subr.mxu0 0.0
    %1105 = vmatpush1.msra.mxu0 0.0
    %1106 = vmatprep.subr.mxu0 0.0
    %1107 = vmatpush1.msra.mxu0 0.0
    %1108 = vmatprep.subr.mxu0 0.0
    %1109 = vmatpush1.msra.mxu0 0.0
    %1110 = vmatprep.subr.mxu0 0.0
    %1111 = vmatpush1.msra.mxu0 0.0
    %1112 = vmatprep.mubr.f32.mxu0 0.0
    %v1113 = vand.u32 %v731, 4294901760
    %1114 = vmatmul.mubr.f32.gmra.mrb[0].mxu0 %v1113
    %v1115 = vpop.f32.mrb[0].mxu0
    %v1116 = vadd.f32 %v1039, %v1115
    %v1117 = vpop.f32.mrb[0].mxu0
    %1118 = vdwg.mxu0
    %1119 = vmatprep.subr.mxu0 0.0
    %v1120 = vand.u32 %v27, 4294901760
    %1121 = vmatpush1.msra.mxu0 %v1120
    %1122 = vmatprep.subr.mxu0 0.0
    %v1123 = vand.u32 %v28, 4294901760
    %1124 = vmatpush1.msra.mxu0 %v1123
    %1125 = vmatprep.subr.mxu0 0.0
    %1126 = vmatpush1.msra.mxu0 0.0
    %1127 = vmatprep.subr.mxu0 0.0
    %1128 = vmatpush1.msra.mxu0 0.0
    %1129 = vmatprep.subr.mxu0 0.0
    %1130 = vmatpush1.msra.mxu0 0.0
    %1131 = vmatprep.subr.mxu0 0.0
    %1132 = vmatpush1.msra.mxu0 0.0
    %1133 = vmatprep.subr.mxu0 0.0
    %1134 = vmatpush1.msra.mxu0 0.0
    %1135 = vmatprep.subr.mxu0 0.0
    %1136 = vmatpush1.msra.mxu0 0.0
    %1137 = vmatprep.subr.mxu0 0.0
    %1138 = vmatpush1.msra.mxu0 0.0
    %1139 = vmatprep.subr.mxu0 0.0
    %1140 = vmatpush1.msra.mxu0 0.0
    %1141 = vmatprep.subr.mxu0 0.0
    %1142 = vmatpush1.msra.mxu0 0.0
    %1143 = vmatprep.subr.mxu0 0.0
    %1144 = vmatpush1.msra.mxu0 0.0
    %1145 = vmatprep.subr.mxu0 0.0
    %1146 = vmatpush1.msra.mxu0 0.0
    %1147 = vmatprep.subr.mxu0 0.0
    %1148 = vmatpush1.msra.mxu0 0.0
    %1149 = vmatprep.subr.mxu0 0.0
    %1150 = vmatpush1.msra.mxu0 0.0
    %1151 = vmatprep.subr.mxu0 0.0
    %1152 = vmatpush1.msra.mxu0 0.0
    %1153 = vmatprep.subr.mxu0 0.0
    %1154 = vmatpush1.msra.mxu0 0.0
    %1155 = vmatprep.subr.mxu0 0.0
    %1156 = vmatpush1.msra.mxu0 0.0
    %1157 = vmatprep.subr.mxu0 0.0
    %1158 = vmatpush1.msra.mxu0 0.0
    %1159 = vmatprep.subr.mxu0 0.0
    %1160 = vmatpush1.msra.mxu0 0.0
    %1161 = vmatprep.subr.mxu0 0.0
    %1162 = vmatpush1.msra.mxu0 0.0
    %1163 = vmatprep.subr.mxu0 0.0
    %1164 = vmatpush1.msra.mxu0 0.0
    %1165 = vmatprep.subr.mxu0 0.0
    %1166 = vmatpush1.msra.mxu0 0.0
    %1167 = vmatprep.subr.mxu0 0.0
    %1168 = vmatpush1.msra.mxu0 0.0
    %1169 = vmatprep.subr.mxu0 0.0
    %1170 = vmatpush1.msra.mxu0 0.0
    %1171 = vmatprep.subr.mxu0 0.0
    %1172 = vmatpush1.msra.mxu0 0.0
    %1173 = vmatprep.subr.mxu0 0.0
    %1174 = vmatpush1.msra.mxu0 0.0
    %1175 = vmatprep.subr.mxu0 0.0
    %1176 = vmatpush1.msra.mxu0 0.0
    %1177 = vmatprep.subr.mxu0 0.0
    %1178 = vmatpush1.msra.mxu0 0.0
    %1179 = vmatprep.subr.mxu0 0.0
    %1180 = vmatpush1.msra.mxu0 0.0
    %1181 = vmatprep.subr.mxu0 0.0
    %1182 = vmatpush1.msra.mxu0 0.0
    %1183 = vmatprep.subr.mxu0 0.0
    %1184 = vmatpush1.msra.mxu0 0.0
    %1185 = vmatprep.mubr.f32.mxu0 0.0
    %v1186 = vand.u32 %v731, 4294901760
    %1187 = vmatmul.mubr.f32.gmra.mrb[0].mxu0 %v1186
    %v1188 = vpop.f32.mrb[0].mxu0
    %v1189 = vadd.f32 %v1116, %v1188
    %v1190 = vpop.f32.mrb[0].mxu0
    %1191 = vdwg.mxu0
    %v1192 = vmul.f32 %v1189, 0.33333334
    %v1193 = vld [vmem:[%s3] sm:$0xff]
    %v1194 = vld [vmem:[%s3 + $0x8] sm:$0xff]
    %v1195 = vld [vmem:[%s3 + $0x10] sm:$0xff]
    %v1196 = vld [vmem:[%s3 + $0x18] sm:$0xff]
    %v1197 = vld [vmem:[%s3 + $0x20] sm:$0xff]
    %v1198 = vld [vmem:[%s3 + $0x28] sm:$0xff]
    %v1199 = vld [vmem:[%s3 + $0x30] sm:$0xff]
    %v1200 = vld [vmem:[%s3 + $0x38] sm:$0xff]
    %v1201 = vld [vmem:[%s3 + $0x40] sm:$0xff]
    %v1202 = vld [vmem:[%s3 + $0x48] sm:$0xff]
    %v1203 = vld [vmem:[%s3 + $0x50] sm:$0xff]
    %v1204 = vld [vmem:[%s3 + $0x58] sm:$0xff]
    %v1205 = vld [vmem:[%s3 + $0x60] sm:$0xff]
    %v1206 = vld [vmem:[%s3 + $0x68] sm:$0xff]
    %v1207 = vld [vmem:[%s3 + $0x70] sm:$0xff]
    %v1208 = vld [vmem:[%s3 + $0x78] sm:$0xff]
    %1209 = vmatprep.subr.mxu0 0.0
    %v1210 = vand.u32 %v1193, 4294901760
    %1211 = vmatpush1.msra.mxu0 %v1210
    %1212 = vmatprep.subr.mxu0 0.0
    %v1213 = vand.u32 %v1194, 4294901760
    %1214 = vmatpush1.msra.mxu0 %v1213
    %1215 = vmatprep.subr.mxu0 0.0
    %v1216 = vand.u32 %v1195, 4294901760
    %1217 = vmatpush1.msra.mxu0 %v1216
    %1218 = vmatprep.subr.mxu0 0.0
    %v1219 = vand.u32 %v1196, 4294901760
    %1220 = vmatpush1.msra.mxu0 %v1219
    %1221 = vmatprep.subr.mxu0 0.0
    %v1222 = vand.u32 %v1197, 4294901760
    %1223 = vmatpush1.msra.mxu0 %v1222
    %1224 = vmatprep.subr.mxu0 0.0
    %v1225 = vand.u32 %v1198, 4294901760
    %1226 = vmatpush1.msra.mxu0 %v1225
    %1227 = vmatprep.subr.mxu0 0.0
    %v1228 = vand.u32 %v1199, 4294901760
    %1229 = vmatpush1.msra.mxu0 %v1228
    %1230 = vmatprep.subr.mxu0 0.0
    %v1231 = vand.u32 %v1200, 4294901760
    %1232 = vmatpush1.msra.mxu0 %v1231
    %1233 = vmatprep.subr.mxu0 0.0
    %v1234 = vand.u32 %v1201, 4294901760
    %1235 = vmatpush1.msra.mxu0 %v1234
    %1236 = vmatprep.subr.mxu0 0.0
    %v1237 = vand.u32 %v1202, 4294901760
    %1238 = vmatpush1.msra.mxu0 %v1237
    %1239 = vmatprep.subr.mxu0 0.0
    %v1240 = vand.u32 %v1203, 4294901760
    %1241 = vmatpush1.msra.mxu0 %v1240
    %1242 = vmatprep.subr.mxu0 0.0
    %v1243 = vand.u32 %v1204, 4294901760
    %1244 = vmatpush1.msra.mxu0 %v1243
    %1245 = vmatprep.subr.mxu0 0.0
    %v1246 = vand.u32 %v1205, 4294901760
    %1247 = vmatpush1.msra.mxu0 %v1246
    %1248 = vmatprep.subr.mxu0 0.0
    %v1249 = vand.u32 %v1206, 4294901760
    %1250 = vmatpush1.msra.mxu0 %v1249
    %1251 = vmatprep.subr.mxu0 0.0
    %v1252 = vand.u32 %v1207, 4294901760
    %1253 = vmatpush1.msra.mxu0 %v1252
    %1254 = vmatprep.subr.mxu0 0.0
    %v1255 = vand.u32 %v1208, 4294901760
    %1256 = vmatpush1.msra.mxu0 %v1255
    %1257 = vmatprep.subr.mxu0 0.0
    %1258 = vmatpush1.msra.mxu0 0.0
    %1259 = vmatprep.subr.mxu0 0.0
    %1260 = vmatpush1.msra.mxu0 0.0
    %1261 = vmatprep.subr.mxu0 0.0
    %1262 = vmatpush1.msra.mxu0 0.0
    %1263 = vmatprep.subr.mxu0 0.0
    %1264 = vmatpush1.msra.mxu0 0.0
    %1265 = vmatprep.subr.mxu0 0.0
    %1266 = vmatpush1.msra.mxu0 0.0
    %1267 = vmatprep.subr.mxu0 0.0
    %1268 = vmatpush1.msra.mxu0 0.0
    %1269 = vmatprep.subr.mxu0 0.0
    %1270 = vmatpush1.msra.mxu0 0.0
    %1271 = vmatprep.subr.mxu0 0.0
    %1272 = vmatpush1.msra.mxu0 0.0
    %1273 = vmatprep.subr.mxu0 0.0
    %1274 = vmatpush1.msra.mxu0 0.0
    %1275 = vmatprep.subr.mxu0 0.0
    %1276 = vmatpush1.msra.mxu0 0.0
    %1277 = vmatprep.subr.mxu0 0.0
    %1278 = vmatpush1.msra.mxu0 0.0
    %1279 = vmatprep.subr.mxu0 0.0
    %1280 = vmatpush1.msra.mxu0 0.0
    %1281 = vmatprep.subr.mxu0 0.0
    %1282 = vmatpush1.msra.mxu0 0.0
    %1283 = vmatprep.subr.mxu0 0.0
    %1284 = vmatpush1.msra.mxu0 0.0
    %1285 = vmatprep.subr.mxu0 0.0
    %1286 = vmatpush1.msra.mxu0 0.0
    %1287 = vmatprep.subr.mxu0 0.0
    %1288 = vmatpush1.msra.mxu0 0.0
    %1289 = vmatprep.mubr.f32.mxu0 0.0
    %v1290 = vand.u32 %v1192, 4294901760
    %v1291 = vsub.f32 %v1192, %v1290
    %v1292 = vand.u32 %v1291, 4294901760
    %v1293 = vsub.f32 %v1291, %v1292
    %v1294 = vand.u32 %v1293, 4294901760
    %1295 = vmatmul.mubr.f32.gmra.mrb[0].mxu0 %v1294
    %v1296 = vpop.f32.mrb[0].mxu0
    %v1297 = vadd.f32 0.0, %v1296
    %v1298 = vpop.f32.mrb[0].mxu0
    %1299 = vdwg.mxu0
    %1300 = vmatprep.subr.mxu0 0.0
    %v1301 = vand.u32 %v1193, 4294901760
    %v1302 = vsub.f32 %v1193, %v1301
    %v1303 = vand.u32 %v1302, 4294901760
    %v1304 = vsub.f32 %v1302, %v1303
    %v1305 = vand.u32 %v1304, 4294901760
    %1306 = vmatpush1.msra.mxu0 %v1305
    %1307 = vmatprep.subr.mxu0 0.0
    %v1308 = vand.u32 %v1194, 4294901760
    %v1309 = vsub.f32 %v1194, %v1308
    %v1310 = vand.u32 %v1309, 4294901760
    %v1311 = vsub.f32 %v1309, %v1310
    %v1312 = vand.u32 %v1311, 4294901760
    %1313 = vmatpush1.msra.mxu0 %v1312
    %1314 = vmatprep.subr.mxu0 0.0
    %v1315 = vand.u32 %v1195, 4294901760
    %v1316 = vsub.f32 %v1195, %v1315
    %v1317 = vand.u32 %v1316, 4294901760
    %v1318 = vsub.f32 %v1316, %v1317
    %v1319 = vand.u32 %v1318, 4294901760
    %1320 = vmatpush1.msra.mxu0 %v1319
    %1321 = vmatprep.subr.mxu0 0.0
    %v1322 = vand.u32 %v1196, 4294901760
    %v1323 = vsub.f32 %v1196, %v1322
    %v1324 = vand.u32 %v1323, 4294901760
    %v1325 = vsub.f32 %v1323, %v1324
    %v1326 = vand.u32 %v1325, 4294901760
    %1327 = vmatpush1.msra.mxu0 %v1326
    %1328 = vmatprep.subr.mxu0 0.0
    %v1329 = vand.u32 %v1197, 4294901760
    %v1330 = vsub.f32 %v1197, %v1329
    %v1331 = vand.u32 %v1330, 4294901760
    %v1332 = vsub.f32 %v1330, %v1331
    %v1333 = vand.u32 %v1332, 4294901760
    %1334 = vmatpush1.msra.mxu0 %v1333
    %1335 = vmatprep.subr.mxu0 0.0
    %v1336 = vand.u32 %v1198, 4294901760
    %v1337 = vsub.f32 %v1198, %v1336
    %v1338 = vand.u32 %v1337, 4294901760
    %v1339 = vsub.f32 %v1337, %v1338
    %v1340 = vand.u32 %v1339, 4294901760
    %1341 = vmatpush1.msra.mxu0 %v1340
    %1342 = vmatprep.subr.mxu0 0.0
    %v1343 = vand.u32 %v1199, 4294901760
    %v1344 = vsub.f32 %v1199, %v1343
    %v1345 = vand.u32 %v1344, 4294901760
    %v1346 = vsub.f32 %v1344, %v1345
    %v1347 = vand.u32 %v1346, 4294901760
    %1348 = vmatpush1.msra.mxu0 %v1347
    %1349 = vmatprep.subr.mxu0 0.0
    %v1350 = vand.u32 %v1200, 4294901760
    %v1351 = vsub.f32 %v1200, %v1350
    %v1352 = vand.u32 %v1351, 4294901760
    %v1353 = vsub.f32 %v1351, %v1352
    %v1354 = vand.u32 %v1353, 4294901760
    %1355 = vmatpush1.msra.mxu0 %v1354
    %1356 = vmatprep.subr.mxu0 0.0
    %v1357 = vand.u32 %v1201, 4294901760
    %v1358 = vsub.f32 %v1201, %v1357
    %v1359 = vand.u32 %v1358, 4294901760
    %v1360 = vsub.f32 %v1358, %v1359
    %v1361 = vand.u32 %v1360, 4294901760
    %1362 = vmatpush1.msra.mxu0 %v1361
    %1363 = vmatprep.subr.mxu0 0.0
    %v1364 = vand.u32 %v1202, 4294901760
    %v1365 = vsub.f32 %v1202, %v1364
    %v1366 = vand.u32 %v1365, 4294901760
    %v1367 = vsub.f32 %v1365, %v1366
    %v1368 = vand.u32 %v1367, 4294901760
    %1369 = vmatpush1.msra.mxu0 %v1368
    %1370 = vmatprep.subr.mxu0 0.0
    %v1371 = vand.u32 %v1203, 4294901760
    %v1372 = vsub.f32 %v1203, %v1371
    %v1373 = vand.u32 %v1372, 4294901760
    %v1374 = vsub.f32 %v1372, %v1373
    %v1375 = vand.u32 %v1374, 4294901760
    %1376 = vmatpush1.msra.mxu0 %v1375
    %1377 = vmatprep.subr.mxu0 0.0
    %v1378 = vand.u32 %v1204, 4294901760
    %v1379 = vsub.f32 %v1204, %v1378
    %v1380 = vand.u32 %v1379, 4294901760
    %v1381 = vsub.f32 %v1379, %v1380
    %v1382 = vand.u32 %v1381, 4294901760
    %1383 = vmatpush1.msra.mxu0 %v1382
    %1384 = vmatprep.subr.mxu0 0.0
    %v1385 = vand.u32 %v1205, 4294901760
    %v1386 = vsub.f32 %v1205, %v1385
    %v1387 = vand.u32 %v1386, 4294901760
    %v1388 = vsub.f32 %v1386, %v1387
    %v1389 = vand.u32 %v1388, 4294901760
    %1390 = vmatpush1.msra.mxu0 %v1389
    %1391 = vmatprep.subr.mxu0 0.0
    %v1392 = vand.u32 %v1206, 4294901760
    %v1393 = vsub.f32 %v1206, %v1392
    %v1394 = vand.u32 %v1393, 4294901760
    %v1395 = vsub.f32 %v1393, %v1394
    %v1396 = vand.u32 %v1395, 4294901760
    %1397 = vmatpush1.msra.mxu0 %v1396
    %1398 = vmatprep.subr.mxu0 0.0
    %v1399 = vand.u32 %v1207, 4294901760
    %v1400 = vsub.f32 %v1207, %v1399
    %v1401 = vand.u32 %v1400, 4294901760
    %v1402 = vsub.f32 %v1400, %v1401
    %v1403 = vand.u32 %v1402, 4294901760
    %1404 = vmatpush1.msra.mxu0 %v1403
    %1405 = vmatprep.subr.mxu0 0.0
    %v1406 = vand.u32 %v1208, 4294901760
    %v1407 = vsub.f32 %v1208, %v1406
    %v1408 = vand.u32 %v1407, 4294901760
    %v1409 = vsub.f32 %v1407, %v1408
    %v1410 = vand.u32 %v1409, 4294901760
    %1411 = vmatpush1.msra.mxu0 %v1410
    %1412 = vmatprep.subr.mxu0 0.0
    %1413 = vmatpush1.msra.mxu0 0.0
    %1414 = vmatprep.subr.mxu0 0.0
    %1415 = vmatpush1.msra.mxu0 0.0
    %1416 = vmatprep.subr.mxu0 0.0
    %1417 = vmatpush1.msra.mxu0 0.0
    %1418 = vmatprep.subr.mxu0 0.0
    %1419 = vmatpush1.msra.mxu0 0.0
    %1420 = vmatprep.subr.mxu0 0.0
    %1421 = vmatpush1.msra.mxu0 0.0
    %1422 = vmatprep.subr.mxu0 0.0
    %1423 = vmatpush1.msra.mxu0 0.0
    %1424 = vmatprep.subr.mxu0 0.0
    %1425 = vmatpush1.msra.mxu0 0.0
    %1426 = vmatprep.subr.mxu0 0.0
    %1427 = vmatpush1.msra.mxu0 0.0
    %1428 = vmatprep.subr.mxu0 0.0
    %1429 = vmatpush1.msra.mxu0 0.0
    %1430 = vmatprep.subr.mxu0 0.0
    %1431 = vmatpush1.msra.mxu0 0.0
    %1432 = vmatprep.subr.mxu0 0.0
    %1433 = vmatpush1.msra.mxu0 0.0
    %1434 = vmatprep.subr.mxu0 0.0
    %1435 = vmatpush1.msra.mxu0 0.0
    %1436 = vmatprep.subr.mxu0 0.0
    %1437 = vmatpush1.msra.mxu0 0.0
    %1438 = vmatprep.subr.mxu0 0.0
    %1439 = vmatpush1.msra.mxu0 0.0
    %1440 = vmatprep.subr.mxu0 0.0
    %1441 = vmatpush1.msra.mxu0 0.0
    %1442 = vmatprep.subr.mxu0 0.0
    %1443 = vmatpush1.msra.mxu0 0.0
    %1444 = vmatprep.mubr.f32.mxu0 0.0
    %v1445 = vand.u32 %v1192, 4294901760
    %1446 = vmatmul.mubr.f32.gmra.mrb[0].mxu0 %v1445
    %v1447 = vpop.f32.mrb[0].mxu0
    %v1448 = vadd.f32 %v1297, %v1447
    %v1449 = vpop.f32.mrb[0].mxu0
    %1450 = vdwg.mxu0
    %1451 = vmatprep.subr.mxu0 0.0
    %v1452 = vand.u32 %v1193, 4294901760
    %v1453 = vsub.f32 %v1193, %v1452
    %1454 = vmatpush1.msra.mxu0 %v1453
    %1455 = vmatprep.subr.mxu0 0.0
    %v1456 = vand.u32 %v1194, 4294901760
    %v1457 = vsub.f32 %v1194, %v1456
    %1458 = vmatpush1.msra.mxu0 %v1457
    %1459 = vmatprep.subr.mxu0 0.0
    %v1460 = vand.u32 %v1195, 4294901760
    %v1461 = vsub.f32 %v1195, %v1460
    %1462 = vmatpush1.msra.mxu0 %v1461
    %1463 = vmatprep.subr.mxu0 0.0
    %v1464 = vand.u32 %v1196, 4294901760
    %v1465 = vsub.f32 %v1196, %v1464
    %1466 = vmatpush1.msra.mxu0 %v1465
    %1467 = vmatprep.subr.mxu0 0.0
    %v1468 = vand.u32 %v1197, 4294901760
    %v1469 = vsub.f32 %v1197, %v1468
    %1470 = vmatpush1.msra.mxu0 %v1469
    %1471 = vmatprep.subr.mxu0 0.0
    %v1472 = vand.u32 %v1198, 4294901760
    %v1473 = vsub.f32 %v1198, %v1472
    %1474 = vmatpush1.msra.mxu0 %v1473
    %1475 = vmatprep.subr.mxu0 0.0
    %v1476 = vand.u32 %v1199, 4294901760
    %v1477 = vsub.f32 %v1199, %v1476
    %1478 = vmatpush1.msra.mxu0 %v1477
    %1479 = vmatprep.subr.mxu0 0.0
    %v1480 = vand.u32 %v1200, 4294901760
    %v1481 = vsub.f32 %v1200, %v1480
    %1482 = vmatpush1.msra.mxu0 %v1481
    %1483 = vmatprep.subr.mxu0 0.0
    %v1484 = vand.u32 %v1201, 4294901760
    %v1485 = vsub.f32 %v1201, %v1484
    %1486 = vmatpush1.msra.mxu0 %v1485
    %1487 = vmatprep.subr.mxu0 0.0
    %v1488 = vand.u32 %v1202, 4294901760
    %v1489 = vsub.f32 %v1202, %v1488
    %1490 = vmatpush1.msra.mxu0 %v1489
    %1491 = vmatprep.subr.mxu0 0.0
    %v1492 = vand.u32 %v1203, 4294901760
    %v1493 = vsub.f32 %v1203, %v1492
    %1494 = vmatpush1.msra.mxu0 %v1493
    %1495 = vmatprep.subr.mxu0 0.0
    %v1496 = vand.u32 %v1204, 4294901760
    %v1497 = vsub.f32 %v1204, %v1496
    %1498 = vmatpush1.msra.mxu0 %v1497
    %1499 = vmatprep.subr.mxu0 0.0
    %v1500 = vand.u32 %v1205, 4294901760
    %v1501 = vsub.f32 %v1205, %v1500
    %1502 = vmatpush1.msra.mxu0 %v1501
    %1503 = vmatprep.subr.mxu0 0.0
    %v1504 = vand.u32 %v1206, 4294901760
    %v1505 = vsub.f32 %v1206, %v1504
    %1506 = vmatpush1.msra.mxu0 %v1505
    %1507 = vmatprep.subr.mxu0 0.0
    %v1508 = vand.u32 %v1207, 4294901760
    %v1509 = vsub.f32 %v1207, %v1508
    %1510 = vmatpush1.msra.mxu0 %v1509
    %1511 = vmatprep.subr.mxu0 0.0
    %v1512 = vand.u32 %v1208, 4294901760
    %v1513 = vsub.f32 %v1208, %v1512
    %1514 = vmatpush1.msra.mxu0 %v1513
    %1515 = vmatprep.subr.mxu0 0.0
    %1516 = vmatpush1.msra.mxu0 0.0
    %1517 = vmatprep.subr.mxu0 0.0
    %1518 = vmatpush1.msra.mxu0 0.0
    %1519 = vmatprep.subr.mxu0 0.0
    %1520 = vmatpush1.msra.mxu0 0.0
    %1521 = vmatprep.subr.mxu0 0.0
    %1522 = vmatpush1.msra.mxu0 0.0
    %1523 = vmatprep.subr.mxu0 0.0
    %1524 = vmatpush1.msra.mxu0 0.0
    %1525 = vmatprep.subr.mxu0 0.0
    %1526 = vmatpush1.msra.mxu0 0.0
    %1527 = vmatprep.subr.mxu0 0.0
    %1528 = vmatpush1.msra.mxu0 0.0
    %1529 = vmatprep.subr.mxu0 0.0
    %1530 = vmatpush1.msra.mxu0 0.0
    %1531 = vmatprep.subr.mxu0 0.0
    %1532 = vmatpush1.msra.mxu0 0.0
    %1533 = vmatprep.subr.mxu0 0.0
    %1534 = vmatpush1.msra.mxu0 0.0
    %1535 = vmatprep.subr.mxu0 0.0
    %1536 = vmatpush1.msra.mxu0 0.0
    %1537 = vmatprep.subr.mxu0 0.0
    %1538 = vmatpush1.msra.mxu0 0.0
    %1539 = vmatprep.subr.mxu0 0.0
    %1540 = vmatpush1.msra.mxu0 0.0
    %1541 = vmatprep.subr.mxu0 0.0
    %1542 = vmatpush1.msra.mxu0 0.0
    %1543 = vmatprep.subr.mxu0 0.0
    %1544 = vmatpush1.msra.mxu0 0.0
    %1545 = vmatprep.subr.mxu0 0.0
    %1546 = vmatpush1.msra.mxu0 0.0
    %1547 = vmatprep.mubr.f32.mxu0 0.0
    %v1548 = vand.u32 %v1192, 4294901760
    %v1549 = vsub.f32 %v1192, %v1548
    %1550 = vmatmul.mubr.f32.gmra.mrb[0].mxu0 %v1549
    %v1551 = vpop.f32.mrb[0].mxu0
    %v1552 = vadd.f32 %v1448, %v1551
    %v1553 = vpop.f32.mrb[0].mxu0
    %1554 = vdwg.mxu0
    %1555 = vmatprep.subr.mxu0 0.0
    %v1556 = vand.u32 %v1193, 4294901760
    %1557 = vmatpush1.msra.mxu0 %v1556
    %1558 = vmatprep.subr.mxu0 0.0
    %v1559 = vand.u32 %v1194, 4294901760
    %1560 = vmatpush1.msra.mxu0 %v1559
    %1561 = vmatprep.subr.mxu0 0.0
    %v1562 = vand.u32 %v1195, 4294901760
    %1563 = vmatpush1.msra.mxu0 %v1562
    %1564 = vmatprep.subr.mxu0 0.0
    %v1565 = vand.u32 %v1196, 4294901760
    %1566 = vmatpush1.msra.mxu0 %v1565
    %1567 = vmatprep.subr.mxu0 0.0
    %v1568 = vand.u32 %v1197, 4294901760
    %1569 = vmatpush1.msra.mxu0 %v1568
    %1570 = vmatprep.subr.mxu0 0.0
    %v1571 = vand.u32 %v1198, 4294901760
    %1572 = vmatpush1.msra.mxu0 %v1571
    %1573 = vmatprep.subr.mxu0 0.0
    %v1574 = vand.u32 %v1199, 4294901760
    %1575 = vmatpush1.msra.mxu0 %v1574
    %1576 = vmatprep.subr.mxu0 0.0
    %v1577 = vand.u32 %v1200, 4294901760
    %1578 = vmatpush1.msra.mxu0 %v1577
    %1579 = vmatprep.subr.mxu0 0.0
    %v1580 = vand.u32 %v1201, 4294901760
    %1581 = vmatpush1.msra.mxu0 %v1580
    %1582 = vmatprep.subr.mxu0 0.0
    %v1583 = vand.u32 %v1202, 4294901760
    %1584 = vmatpush1.msra.mxu0 %v1583
    %1585 = vmatprep.subr.mxu0 0.0
    %v1586 = vand.u32 %v1203, 4294901760
    %1587 = vmatpush1.msra.mxu0 %v1586
    %1588 = vmatprep.subr.mxu0 0.0
    %v1589 = vand.u32 %v1204, 4294901760
    %1590 = vmatpush1.msra.mxu0 %v1589
    %1591 = vmatprep.subr.mxu0 0.0
    %v1592 = vand.u32 %v1205, 4294901760
    %1593 = vmatpush1.msra.mxu0 %v1592
    %1594 = vmatprep.subr.mxu0 0.0
    %v1595 = vand.u32 %v1206, 4294901760
    %1596 = vmatpush1.msra.mxu0 %v1595
    %1597 = vmatprep.subr.mxu0 0.0
    %v1598 = vand.u32 %v1207, 4294901760
    %1599 = vmatpush1.msra.mxu0 %v1598
    %1600 = vmatprep.subr.mxu0 0.0
    %v1601 = vand.u32 %v1208, 4294901760
    %1602 = vmatpush1.msra.mxu0 %v1601
    %1603 = vmatprep.subr.mxu0 0.0
    %1604 = vmatpush1.msra.mxu0 0.0
    %1605 = vmatprep.subr.mxu0 0.0
    %1606 = vmatpush1.msra.mxu0 0.0
    %1607 = vmatprep.subr.mxu0 0.0
    %1608 = vmatpush1.msra.mxu0 0.0
    %1609 = vmatprep.subr.mxu0 0.0
    %1610 = vmatpush1.msra.mxu0 0.0
    %1611 = vmatprep.subr.mxu0 0.0
    %1612 = vmatpush1.msra.mxu0 0.0
    %1613 = vmatprep.subr.mxu0 0.0
    %1614 = vmatpush1.msra.mxu0 0.0
    %1615 = vmatprep.subr.mxu0 0.0
    %1616 = vmatpush1.msra.mxu0 0.0
    %1617 = vmatprep.subr.mxu0 0.0
    %1618 = vmatpush1.msra.mxu0 0.0
    %1619 = vmatprep.subr.mxu0 0.0
    %1620 = vmatpush1.msra.mxu0 0.0
    %1621 = vmatprep.subr.mxu0 0.0
    %1622 = vmatpush1.msra.mxu0 0.0
    %1623 = vmatprep.subr.mxu0 0.0
    %1624 = vmatpush1.msra.mxu0 0.0
    %1625 = vmatprep.subr.mxu0 0.0
    %1626 = vmatpush1.msra.mxu0 0.0
    %1627 = vmatprep.subr.mxu0 0.0
    %1628 = vmatpush1.msra.mxu0 0.0
    %1629 = vmatprep.subr.mxu0 0.0
    %1630 = vmatpush1.msra.mxu0 0.0
    %1631 = vmatprep.subr.mxu0 0.0
    %1632 = vmatpush1.msra.mxu0 0.0
    %1633 = vmatprep.subr.mxu0 0.0
    %1634 = vmatpush1.msra.mxu0 0.0
    %1635 = vmatprep.mubr.f32.mxu0 0.0
    %v1636 = vand.u32 %v1192, 4294901760
    %v1637 = vsub.f32 %v1192, %v1636
    %v1638 = vand.u32 %v1637, 4294901760
    %1639 = vmatmul.mubr.f32.gmra.mrb[0].mxu0 %v1638
    %v1640 = vpop.f32.mrb[0].mxu0
    %v1641 = vadd.f32 %v1552, %v1640
    %v1642 = vpop.f32.mrb[0].mxu0
    %1643 = vdwg.mxu0
    %1644 = vmatprep.subr.mxu0 0.0
    %v1645 = vand.u32 %v1193, 4294901760
    %v1646 = vsub.f32 %v1193, %v1645
    %v1647 = vand.u32 %v1646, 4294901760
    %1648 = vmatpush1.msra.mxu0 %v1647
    %1649 = vmatprep.subr.mxu0 0.0
    %v1650 = vand.u32 %v1194, 4294901760
    %v1651 = vsub.f32 %v1194, %v1650
    %v1652 = vand.u32 %v1651, 4294901760
    %1653 = vmatpush1.msra.mxu0 %v1652
    %1654 = vmatprep.subr.mxu0 0.0
    %v1655 = vand.u32 %v1195, 4294901760
    %v1656 = vsub.f32 %v1195, %v1655
    %v1657 = vand.u32 %v1656, 4294901760
    %1658 = vmatpush1.msra.mxu0 %v1657
    %1659 = vmatprep.subr.mxu0 0.0
    %v1660 = vand.u32 %v1196, 4294901760
    %v1661 = vsub.f32 %v1196, %v1660
    %v1662 = vand.u32 %v1661, 4294901760
    %1663 = vmatpush1.msra.mxu0 %v1662
    %1664 = vmatprep.subr.mxu0 0.0
    %v1665 = vand.u32 %v1197, 4294901760
    %v1666 = vsub.f32 %v1197, %v1665
    %v1667 = vand.u32 %v1666, 4294901760
    %1668 = vmatpush1.msra.mxu0 %v1667
    %1669 = vmatprep.subr.mxu0 0.0
    %v1670 = vand.u32 %v1198, 4294901760
    %v1671 = vsub.f32 %v1198, %v1670
    %v1672 = vand.u32 %v1671, 4294901760
    %1673 = vmatpush1.msra.mxu0 %v1672
    %1674 = vmatprep.subr.mxu0 0.0
    %v1675 = vand.u32 %v1199, 4294901760
    %v1676 = vsub.f32 %v1199, %v1675
    %v1677 = vand.u32 %v1676, 4294901760
    %1678 = vmatpush1.msra.mxu0 %v1677
    %1679 = vmatprep.subr.mxu0 0.0
    %v1680 = vand.u32 %v1200, 4294901760
    %v1681 = vsub.f32 %v1200, %v1680
    %v1682 = vand.u32 %v1681, 4294901760
    %1683 = vmatpush1.msra.mxu0 %v1682
    %1684 = vmatprep.subr.mxu0 0.0
    %v1685 = vand.u32 %v1201, 4294901760
    %v1686 = vsub.f32 %v1201, %v1685
    %v1687 = vand.u32 %v1686, 4294901760
    %1688 = vmatpush1.msra.mxu0 %v1687
    %1689 = vmatprep.subr.mxu0 0.0
    %v1690 = vand.u32 %v1202, 4294901760
    %v1691 = vsub.f32 %v1202, %v1690
    %v1692 = vand.u32 %v1691, 4294901760
    %1693 = vmatpush1.msra.mxu0 %v1692
    %1694 = vmatprep.subr.mxu0 0.0
    %v1695 = vand.u32 %v1203, 4294901760
    %v1696 = vsub.f32 %v1203, %v1695
    %v1697 = vand.u32 %v1696, 4294901760
    %1698 = vmatpush1.msra.mxu0 %v1697
    %1699 = vmatprep.subr.mxu0 0.0
    %v1700 = vand.u32 %v1204, 4294901760
    %v1701 = vsub.f32 %v1204, %v1700
    %v1702 = vand.u32 %v1701, 4294901760
    %1703 = vmatpush1.msra.mxu0 %v1702
    %1704 = vmatprep.subr.mxu0 0.0
    %v1705 = vand.u32 %v1205, 4294901760
    %v1706 = vsub.f32 %v1205, %v1705
    %v1707 = vand.u32 %v1706, 4294901760
    %1708 = vmatpush1.msra.mxu0 %v1707
    %1709 = vmatprep.subr.mxu0 0.0
    %v1710 = vand.u32 %v1206, 4294901760
    %v1711 = vsub.f32 %v1206, %v1710
    %v1712 = vand.u32 %v1711, 4294901760
    %1713 = vmatpush1.msra.mxu0 %v1712
    %1714 = vmatprep.subr.mxu0 0.0
    %v1715 = vand.u32 %v1207, 4294901760
    %v1716 = vsub.f32 %v1207, %v1715
    %v1717 = vand.u32 %v1716, 4294901760
    %1718 = vmatpush1.msra.mxu0 %v1717
    %1719 = vmatprep.subr.mxu0 0.0
    %v1720 = vand.u32 %v1208, 4294901760
    %v1721 = vsub.f32 %v1208, %v1720
    %v1722 = vand.u32 %v1721, 4294901760
    %1723 = vmatpush1.msra.mxu0 %v1722
    %1724 = vmatprep.subr.mxu0 0.0
    %1725 = vmatpush1.msra.mxu0 0.0
    %1726 = vmatprep.subr.mxu0 0.0
    %1727 = vmatpush1.msra.mxu0 0.0
    %1728 = vmatprep.subr.mxu0 0.0
    %1729 = vmatpush1.msra.mxu0 0.0
    %1730 = vmatprep.subr.mxu0 0.0
    %1731 = vmatpush1.msra.mxu0 0.0
    %1732 = vmatprep.subr.mxu0 0.0
    %1733 = vmatpush1.msra.mxu0 0.0
    %1734 = vmatprep.subr.mxu0 0.0
    %1735 = vmatpush1.msra.mxu0 0.0
    %1736 = vmatprep.subr.mxu0 0.0
    %1737 = vmatpush1.msra.mxu0 0.0
    %1738 = vmatprep.subr.mxu0 0.0
    %1739 = vmatpush1.msra.mxu0 0.0
    %1740 = vmatprep.subr.mxu0 0.0
    %1741 = vmatpush1.msra.mxu0 0.0
    %1742 = vmatprep.subr.mxu0 0.0
    %1743 = vmatpush1.msra.mxu0 0.0
    %1744 = vmatprep.subr.mxu0 0.0
    %1745 = vmatpush1.msra.mxu0 0.0
    %1746 = vmatprep.subr.mxu0 0.0
    %1747 = vmatpush1.msra.mxu0 0.0
    %1748 = vmatprep.subr.mxu0 0.0
    %1749 = vmatpush1.msra.mxu0 0.0
    %1750 = vmatprep.subr.mxu0 0.0
    %1751 = vmatpush1.msra.mxu0 0.0
    %1752 = vmatprep.subr.mxu0 0.0
    %1753 = vmatpush1.msra.mxu0 0.0
    %1754 = vmatprep.subr.mxu0 0.0
    %1755 = vmatpush1.msra.mxu0 0.0
    %1756 = vmatprep.mubr.f32.mxu0 0.0
    %v1757 = vand.u32 %v1192, 4294901760
    %1758 = vmatmul.mubr.f32.gmra.mrb[0].mxu0 %v1757
    %v1759 = vpop.f32.mrb[0].mxu0
    %v1760 = vadd.f32 %v1641, %v1759
    %v1761 = vpop.f32.mrb[0].mxu0
    %1762 = vdwg.mxu0
    %1763 = vmatprep.subr.mxu0 0.0
    %v1764 = vand.u32 %v1193, 4294901760
    %1765 = vmatpush1.msra.mxu0 %v1764
    %1766 = vmatprep.subr.mxu0 0.0
    %v1767 = vand.u32 %v1194, 4294901760
    %1768 = vmatpush1.msra.mxu0 %v1767
    %1769 = vmatprep.subr.mxu0 0.0
    %v1770 = vand.u32 %v1195, 4294901760
    %1771 = vmatpush1.msra.mxu0 %v1770
    %1772 = vmatprep.subr.mxu0 0.0
    %v1773 = vand.u32 %v1196, 4294901760
    %1774 = vmatpush1.msra.mxu0 %v1773
    %1775 = vmatprep.subr.mxu0 0.0
    %v1776 = vand.u32 %v1197, 4294901760
    %1777 = vmatpush1.msra.mxu0 %v1776
    %1778 = vmatprep.subr.mxu0 0.0
    %v1779 = vand.u32 %v1198, 4294901760
    %1780 = vmatpush1.msra.mxu0 %v1779
    %1781 = vmatprep.subr.mxu0 0.0
    %v1782 = vand.u32 %v1199, 4294901760
    %1783 = vmatpush1.msra.mxu0 %v1782
    %1784 = vmatprep.subr.mxu0 0.0
    %v1785 = vand.u32 %v1200, 4294901760
    %1786 = vmatpush1.msra.mxu0 %v1785
    %1787 = vmatprep.subr.mxu0 0.0
    %v1788 = vand.u32 %v1201, 4294901760
    %1789 = vmatpush1.msra.mxu0 %v1788
    %1790 = vmatprep.subr.mxu0 0.0
    %v1791 = vand.u32 %v1202, 4294901760
    %1792 = vmatpush1.msra.mxu0 %v1791
    %1793 = vmatprep.subr.mxu0 0.0
    %v1794 = vand.u32 %v1203, 4294901760
    %1795 = vmatpush1.msra.mxu0 %v1794
    %1796 = vmatprep.subr.mxu0 0.0
    %v1797 = vand.u32 %v1204, 4294901760
    %1798 = vmatpush1.msra.mxu0 %v1797
    %1799 = vmatprep.subr.mxu0 0.0
    %v1800 = vand.u32 %v1205, 4294901760
    %1801 = vmatpush1.msra.mxu0 %v1800
    %1802 = vmatprep.subr.mxu0 0.0
    %v1803 = vand.u32 %v1206, 4294901760
    %1804 = vmatpush1.msra.mxu0 %v1803
    %1805 = vmatprep.subr.mxu0 0.0
    %v1806 = vand.u32 %v1207, 4294901760
    %1807 = vmatpush1.msra.mxu0 %v1806
    %1808 = vmatprep.subr.mxu0 0.0
    %v1809 = vand.u32 %v1208, 4294901760
    %1810 = vmatpush1.msra.mxu0 %v1809
    %1811 = vmatprep.subr.mxu0 0.0
    %1812 = vmatpush1.msra.mxu0 0.0
    %1813 = vmatprep.subr.mxu0 0.0
    %1814 = vmatpush1.msra.mxu0 0.0
    %1815 = vmatprep.subr.mxu0 0.0
    %1816 = vmatpush1.msra.mxu0 0.0
    %1817 = vmatprep.subr.mxu0 0.0
    %1818 = vmatpush1.msra.mxu0 0.0
    %1819 = vmatprep.subr.mxu0 0.0
    %1820 = vmatpush1.msra.mxu0 0.0
    %1821 = vmatprep.subr.mxu0 0.0
    %1822 = vmatpush1.msra.mxu0 0.0
    %1823 = vmatprep.subr.mxu0 0.0
    %1824 = vmatpush1.msra.mxu0 0.0
    %1825 = vmatprep.subr.mxu0 0.0
    %1826 = vmatpush1.msra.mxu0 0.0
    %1827 = vmatprep.subr.mxu0 0.0
    %1828 = vmatpush1.msra.mxu0 0.0
    %1829 = vmatprep.subr.mxu0 0.0
    %1830 = vmatpush1.msra.mxu0 0.0
    %1831 = vmatprep.subr.mxu0 0.0
    %1832 = vmatpush1.msra.mxu0 0.0
    %1833 = vmatprep.subr.mxu0 0.0
    %1834 = vmatpush1.msra.mxu0 0.0
    %1835 = vmatprep.subr.mxu0 0.0
    %1836 = vmatpush1.msra.mxu0 0.0
    %1837 = vmatprep.subr.mxu0 0.0
    %1838 = vmatpush1.msra.mxu0 0.0
    %1839 = vmatprep.subr.mxu0 0.0
    %1840 = vmatpush1.msra.mxu0 0.0
    %1841 = vmatprep.subr.mxu0 0.0
    %1842 = vmatpush1.msra.mxu0 0.0
    %1843 = vmatprep.mubr.f32.mxu0 0.0
    %v1844 = vand.u32 %v1192, 4294901760
    %1845 = vmatmul.mubr.f32.gmra.mrb[0].mxu0 %v1844
    %v1846 = vpop.f32.mrb[0].mxu0
    %v1847 = vadd.f32 %v1760, %v1846
    %v1848 = vpop.f32.mrb[0].mxu0
    %1849 = vdwg.mxu0
    %v1850 = vlaneseq
    %v1851 = vshrl.u32 %v1850, 7
    %v1852 = vsub.s32 0, %v1851
    %v1853 = vrot.slane %v18, %v1852
    %s1855 = sor.u32 256, 7
    %1856 = vbcast.lane.b32.xlu0 %v1853, %s1855
    %v1857 = vpop.permute.xlu0 %1856
    %v1858 = vlaneseq
    %v1859 = vshrl.u32 %v1858, 7
    %v1860 = vsub.s32 1, %v1859
    %v1861 = vrot.slane %v18, %v1860
    %s1863 = sor.u32 256, 7
    %1864 = vbcast.lane.b32.xlu0 %v1861, %s1863
    %v1865 = vpop.permute.xlu0 %1864
    %v1866 = vlaneseq
    %v1867 = vshrl.u32 %v1866, 7
    %v1868 = vsub.s32 2, %v1867
    %v1869 = vrot.slane %v18, %v1868
    %s1871 = sor.u32 256, 7
    %1872 = vbcast.lane.b32.xlu0 %v1869, %s1871
    %v1873 = vpop.permute.xlu0 %1872
    %v1874 = vlaneseq
    %v1875 = vshrl.u32 %v1874, 7
    %v1876 = vsub.s32 3, %v1875
    %v1877 = vrot.slane %v18, %v1876
    %s1879 = sor.u32 256, 7
    %1880 = vbcast.lane.b32.xlu0 %v1877, %s1879
    %v1881 = vpop.permute.xlu0 %1880
    %v1882 = vlaneseq
    %v1883 = vshrl.u32 %v1882, 7
    %v1884 = vsub.s32 4, %v1883
    %v1885 = vrot.slane %v18, %v1884
    %s1887 = sor.u32 256, 7
    %1888 = vbcast.lane.b32.xlu0 %v1885, %s1887
    %v1889 = vpop.permute.xlu0 %1888
    %v1890 = vlaneseq
    %v1891 = vshrl.u32 %v1890, 7
    %v1892 = vsub.s32 5, %v1891
    %v1893 = vrot.slane %v18, %v1892
    %s1895 = sor.u32 256, 7
    %1896 = vbcast.lane.b32.xlu0 %v1893, %s1895
    %v1897 = vpop.permute.xlu0 %1896
    %v1898 = vlaneseq
    %v1899 = vshrl.u32 %v1898, 7
    %v1900 = vsub.s32 6, %v1899
    %v1901 = vrot.slane %v18, %v1900
    %s1903 = sor.u32 256, 7
    %1904 = vbcast.lane.b32.xlu0 %v1901, %s1903
    %v1905 = vpop.permute.xlu0 %1904
    %v1906 = vlaneseq
    %v1907 = vshrl.u32 %v1906, 7
    %v1908 = vsub.s32 7, %v1907
    %v1909 = vrot.slane %v18, %v1908
    %s1911 = sor.u32 256, 7
    %1912 = vbcast.lane.b32.xlu0 %v1909, %s1911
    %v1913 = vpop.permute.xlu0 %1912
    %vm1914 = vcmp.eq.s32.totalorder %v20, %v1857
    %vm1915 = vcmp.eq.s32.totalorder %v20, %v1865
    %vm1916 = vcmp.eq.s32.totalorder %v20, %v1873
    %vm1917 = vcmp.eq.s32.totalorder %v20, %v1881
    %vm1918 = vcmp.eq.s32.totalorder %v20, %v1889
    %vm1919 = vcmp.eq.s32.totalorder %v20, %v1897
    %vm1920 = vcmp.eq.s32.totalorder %v20, %v1905
    %vm1921 = vcmp.eq.s32.totalorder %v20, %v1913
    %v1922 = vsel %vm1914, 1, 0
    %v1923 = vsel %vm1915, 1, 0
    %v1924 = vsel %vm1916, 1, 0
    %v1925 = vsel %vm1917, 1, 0
    %v1926 = vsel %vm1918, 1, 0
    %v1927 = vsel %vm1919, 1, 0
    %v1928 = vsel %vm1920, 1, 0
    %v1929 = vsel %vm1921, 1, 0
    %v1930 = vcvt.s32.f32 %v1922
    %v1931 = vcvt.s32.f32 %v1923
    %v1932 = vcvt.s32.f32 %v1924
    %v1933 = vcvt.s32.f32 %v1925
    %v1934 = vcvt.s32.f32 %v1926
    %v1935 = vcvt.s32.f32 %v1927
    %v1936 = vcvt.s32.f32 %v1928
    %v1937 = vcvt.s32.f32 %v1929
    %v1939 = vcombine.high %v1847, %v1847
    %v1941 = vunpack.c.l.s4 1966171168
    %v1942 = vunpack.c.0.s8 %v1941
    %v1943 = vlaneseq
    %v1944 = vshrl.u32 %v1943, 7
    %v1945 = vsub.s32 %v1942, %v1944
    %v1946 = vrot.slane %v1847, %v1945
    %v1948 = vunpack.c.l.s4 1966171168
    %v1949 = vunpack.c.0.s8 %v1948
    %v1950 = vlaneseq
    %v1951 = vshrl.u32 %v1950, 7
    %v1952 = vsub.s32 %v1949, %v1951
    %v1953 = vrot.slane %v1939, %v1952
    %v1954 = vcombine.high %v1946, %v1946
    %v1955 = vcombine.high %v1953, %v1953
    %v1957 = vunpack.c.l.s4 1966171168
    %v1958 = vunpack.c.0.s8 %v1957
    %v1959 = vlaneseq
    %v1960 = vshrl.u32 %v1959, 7
    %v1961 = vsub.s32 %v1958, %v1960
    %v1962 = vrot.slane %v1946, %v1961
    %v1964 = vunpack.c.l.s4 1966171168
    %v1965 = vunpack.c.0.s8 %v1964
    %v1966 = vlaneseq
    %v1967 = vshrl.u32 %v1966, 7
    %v1968 = vsub.s32 %v1965, %v1967
    %v1969 = vrot.slane %v1953, %v1968
    %v1971 = vunpack.c.l.s4 1966171168
    %v1972 = vunpack.c.0.s8 %v1971
    %v1973 = vlaneseq
    %v1974 = vshrl.u32 %v1973, 7
    %v1975 = vsub.s32 %v1972, %v1974
    %v1976 = vrot.slane %v1954, %v1975
    %v1978 = vunpack.c.l.s4 1966171168
    %v1979 = vunpack.c.0.s8 %v1978
    %v1980 = vlaneseq
    %v1981 = vshrl.u32 %v1980, 7
    %v1982 = vsub.s32 %v1979, %v1981
    %v1983 = vrot.slane %v1955, %v1982
    %v1984 = vcombine.high %v1962, %v1962
    %v1985 = vcombine.high %v1969, %v1969
    %v1986 = vcombine.high %v1976, %v1976
    %v1987 = vcombine.high %v1983, %v1983
    %v1988 = vlaneseq
    %v1989 = vshrl.u32 %v1988, 7
    %v1990 = vsub.s32 0, %v1989
    %v1991 = vrot.slane %v1962, %v1990
    %v1992 = vlaneseq
    %v1993 = vshrl.u32 %v1992, 7
    %v1994 = vsub.s32 0, %v1993
    %v1995 = vrot.slane %v1976, %v1994
    %v1996 = vlaneseq
    %v1997 = vshrl.u32 %v1996, 7
    %v1998 = vsub.s32 0, %v1997
    %v1999 = vrot.slane %v1984, %v1998
    %v2000 = vlaneseq
    %v2001 = vshrl.u32 %v2000, 7
    %v2002 = vsub.s32 0, %v2001
    %v2003 = vrot.slane %v1986, %v2002
    %v2004 = vlaneseq
    %v2005 = vshrl.u32 %v2004, 7
    %v2006 = vsub.s32 0, %v2005
    %v2007 = vrot.slane %v1969, %v2006
    %v2008 = vlaneseq
    %v2009 = vshrl.u32 %v2008, 7
    %v2010 = vsub.s32 0, %v2009
    %v2011 = vrot.slane %v1983, %v2010
    %v2012 = vlaneseq
    %v2013 = vshrl.u32 %v2012, 7
    %v2014 = vsub.s32 0, %v2013
    %v2015 = vrot.slane %v1985, %v2014
    %v2016 = vlaneseq
    %v2017 = vshrl.u32 %v2016, 7
    %v2018 = vsub.s32 0, %v2017
    %v2019 = vrot.slane %v1987, %v2018
    %v2028 = vmul.f32 %v1930, %v1991
    %v2029 = vmul.f32 %v1931, %v1995
    %v2030 = vmul.f32 %v1932, %v1999
    %v2031 = vmul.f32 %v1933, %v2003
    %v2032 = vmul.f32 %v1934, %v2007
    %v2033 = vmul.f32 %v1935, %v2011
    %v2034 = vmul.f32 %v1936, %v2015
    %v2035 = vmul.f32 %v1937, %v2019
    %vm2036 = vcmask 523264
    %v2037 = vsel %vm2036, %v2028, 0.0
    %2038 = vadd.xlane.f32.xlu0 %v2037
    %v2039 = vpop.xlane.xlu0 %2038
    %v2040 = vsel %vm2036, %v2029, 0.0
    %2041 = vadd.xlane.f32.xlu0 %v2040
    %v2042 = vpop.xlane.xlu0 %2041
    %v2043 = vsel %vm2036, %v2030, 0.0
    %2044 = vadd.xlane.f32.xlu0 %v2043
    %v2045 = vpop.xlane.xlu0 %2044
    %v2046 = vsel %vm2036, %v2031, 0.0
    %2047 = vadd.xlane.f32.xlu0 %v2046
    %v2048 = vpop.xlane.xlu0 %2047
    %v2049 = vsel %vm2036, %v2032, 0.0
    %2050 = vadd.xlane.f32.xlu0 %v2049
    %v2051 = vpop.xlane.xlu0 %2050
    %v2052 = vsel %vm2036, %v2033, 0.0
    %2053 = vadd.xlane.f32.xlu0 %v2052
    %v2054 = vpop.xlane.xlu0 %2053
    %v2055 = vsel %vm2036, %v2034, 0.0
    %2056 = vadd.xlane.f32.xlu0 %v2055
    %v2057 = vpop.xlane.xlu0 %2056
    %v2058 = vsel %vm2036, %v2035, 0.0
    %2059 = vadd.xlane.f32.xlu0 %v2058
    %v2060 = vpop.xlane.xlu0 %2059
    %vm2061 = vcmp.lt.s32.totalorder %v20, 3
    %v2062 = vsel %vm2061, 1, 0
    %v2063 = vcvt.s32.f32 %v2062
    %v2064 = vsub.f32 0.0, %v2039
    %v2065 = vsub.f32 0.0, %v2042
    %v2066 = vsub.f32 0.0, %v2045
    %v2067 = vsub.f32 0.0, %v2048
    %v2068 = vsub.f32 0.0, %v2051
    %v2069 = vsub.f32 0.0, %v2054
    %v2070 = vsub.f32 0.0, %v2057
    %v2071 = vsub.f32 0.0, %v2060
    %v2072 = vmax.f32 %v2064, 0.0
    %v2073 = vmax.f32 %v2065, 0.0
    %v2074 = vmax.f32 %v2066, 0.0
    %v2075 = vmax.f32 %v2067, 0.0
    %v2076 = vmax.f32 %v2068, 0.0
    %v2077 = vmax.f32 %v2069, 0.0
    %v2078 = vmax.f32 %v2070, 0.0
    %v2079 = vmax.f32 %v2071, 0.0
    %v2080 = vand.u32 2147483647, %v2064
    %v2081 = vand.u32 2147483647, %v2065
    %v2082 = vand.u32 2147483647, %v2066
    %v2083 = vand.u32 2147483647, %v2067
    %v2084 = vand.u32 2147483647, %v2068
    %v2085 = vand.u32 2147483647, %v2069
    %v2086 = vand.u32 2147483647, %v2070
    %v2087 = vand.u32 2147483647, %v2071
    %v2088 = vsub.f32 0.0, %v2080
    %v2089 = vsub.f32 0.0, %v2081
    %v2090 = vsub.f32 0.0, %v2082
    %v2091 = vsub.f32 0.0, %v2083
    %v2092 = vsub.f32 0.0, %v2084
    %v2093 = vsub.f32 0.0, %v2085
    %v2094 = vsub.f32 0.0, %v2086
    %v2095 = vsub.f32 0.0, %v2087
    %v2096 = vmul.f32 %v2088, 1.442695
    %v2097 = vpow.pop %v2096
    %v2098 = vmul.f32 %v2089, 1.442695
    %v2099 = vpow.pop %v2098
    %v2100 = vmul.f32 %v2090, 1.442695
    %v2101 = vpow.pop %v2100
    %v2102 = vmul.f32 %v2091, 1.442695
    %v2103 = vpow.pop %v2102
    %v2104 = vmul.f32 %v2092, 1.442695
    %v2105 = vpow.pop %v2104
    %v2106 = vmul.f32 %v2093, 1.442695
    %v2107 = vpow.pop %v2106
    %v2108 = vmul.f32 %v2094, 1.442695
    %v2109 = vpow.pop %v2108
    %v2110 = vmul.f32 %v2095, 1.442695
    %v2111 = vpow.pop %v2110
    %v2112 = vadd.f32 %v2097, 1.0
    %v2113 = vadd.f32 %v2099, 1.0
    %v2114 = vadd.f32 %v2101, 1.0
    %v2115 = vadd.f32 %v2103, 1.0
    %v2116 = vadd.f32 %v2105, 1.0
    %v2117 = vadd.f32 %v2107, 1.0
    %v2118 = vadd.f32 %v2109, 1.0
    %v2119 = vadd.f32 %v2111, 1.0
    %v2120 = vlog2.pop %v2112
    %v2121 = vmul.f32 %v2120, 0.6931472
    %v2122 = vlog2.pop %v2113
    %v2123 = vmul.f32 %v2122, 0.6931472
    %v2124 = vlog2.pop %v2114
    %v2125 = vmul.f32 %v2124, 0.6931472
    %v2126 = vlog2.pop %v2115
    %v2127 = vmul.f32 %v2126, 0.6931472
    %v2128 = vlog2.pop %v2116
    %v2129 = vmul.f32 %v2128, 0.6931472
    %v2130 = vlog2.pop %v2117
    %v2131 = vmul.f32 %v2130, 0.6931472
    %v2132 = vlog2.pop %v2118
    %v2133 = vmul.f32 %v2132, 0.6931472
    %v2134 = vlog2.pop %v2119
    %v2135 = vmul.f32 %v2134, 0.6931472
    %v2136 = vadd.f32 %v2072, %v2121
    %v2137 = vadd.f32 %v2073, %v2123
    %v2138 = vadd.f32 %v2074, %v2125
    %v2139 = vadd.f32 %v2075, %v2127
    %v2140 = vadd.f32 %v2076, %v2129
    %v2141 = vadd.f32 %v2077, %v2131
    %v2142 = vadd.f32 %v2078, %v2133
    %v2143 = vadd.f32 %v2079, %v2135
    %v2144 = vsub.f32 0.0, %v2136
    %v2145 = vsub.f32 0.0, %v2137
    %v2146 = vsub.f32 0.0, %v2138
    %v2147 = vsub.f32 0.0, %v2139
    %v2148 = vsub.f32 0.0, %v2140
    %v2149 = vsub.f32 0.0, %v2141
    %v2150 = vsub.f32 0.0, %v2142
    %v2151 = vsub.f32 0.0, %v2143
    %v2152 = vmax.f32 %v2144, -100.0
    %v2153 = vmax.f32 %v2145, -100.0
    %v2154 = vmax.f32 %v2146, -100.0
    %v2155 = vmax.f32 %v2147, -100.0
    %v2156 = vmax.f32 %v2148, -100.0
    %v2157 = vmax.f32 %v2149, -100.0
    %v2158 = vmax.f32 %v2150, -100.0
    %v2159 = vmax.f32 %v2151, -100.0
    %v2160 = vmax.f32 %v2039, 0.0
    %v2161 = vmax.f32 %v2042, 0.0
    %v2162 = vmax.f32 %v2045, 0.0
    %v2163 = vmax.f32 %v2048, 0.0
    %v2164 = vmax.f32 %v2051, 0.0
    %v2165 = vmax.f32 %v2054, 0.0
    %v2166 = vmax.f32 %v2057, 0.0
    %v2167 = vmax.f32 %v2060, 0.0
    %v2168 = vand.u32 2147483647, %v2039
    %v2169 = vand.u32 2147483647, %v2042
    %v2170 = vand.u32 2147483647, %v2045
    %v2171 = vand.u32 2147483647, %v2048
    %v2172 = vand.u32 2147483647, %v2051
    %v2173 = vand.u32 2147483647, %v2054
    %v2174 = vand.u32 2147483647, %v2057
    %v2175 = vand.u32 2147483647, %v2060
    %v2176 = vsub.f32 0.0, %v2168
    %v2177 = vsub.f32 0.0, %v2169
    %v2178 = vsub.f32 0.0, %v2170
    %v2179 = vsub.f32 0.0, %v2171
    %v2180 = vsub.f32 0.0, %v2172
    %v2181 = vsub.f32 0.0, %v2173
    %v2182 = vsub.f32 0.0, %v2174
    %v2183 = vsub.f32 0.0, %v2175
    %v2184 = vmul.f32 %v2176, 1.442695
    %v2185 = vpow.pop %v2184
    %v2186 = vmul.f32 %v2177, 1.442695
    %v2187 = vpow.pop %v2186
    %v2188 = vmul.f32 %v2178, 1.442695
    %v2189 = vpow.pop %v2188
    %v2190 = vmul.f32 %v2179, 1.442695
    %v2191 = vpow.pop %v2190
    %v2192 = vmul.f32 %v2180, 1.442695
    %v2193 = vpow.pop %v2192
    %v2194 = vmul.f32 %v2181, 1.442695
    %v2195 = vpow.pop %v2194
    %v2196 = vmul.f32 %v2182, 1.442695
    %v2197 = vpow.pop %v2196
    %v2198 = vmul.f32 %v2183, 1.442695
    %v2199 = vpow.pop %v2198
    %v2200 = vadd.f32 %v2185, 1.0
    %v2201 = vadd.f32 %v2187, 1.0
    %v2202 = vadd.f32 %v2189, 1.0
    %v2203 = vadd.f32 %v2191, 1.0
    %v2204 = vadd.f32 %v2193, 1.0
    %v2205 = vadd.f32 %v2195, 1.0
    %v2206 = vadd.f32 %v2197, 1.0
    %v2207 = vadd.f32 %v2199, 1.0
    %v2208 = vlog2.pop %v2200
    %v2209 = vmul.f32 %v2208, 0.6931472
    %v2210 = vlog2.pop %v2201
    %v2211 = vmul.f32 %v2210, 0.6931472
    %v2212 = vlog2.pop %v2202
    %v2213 = vmul.f32 %v2212, 0.6931472
    %v2214 = vlog2.pop %v2203
    %v2215 = vmul.f32 %v2214, 0.6931472
    %v2216 = vlog2.pop %v2204
    %v2217 = vmul.f32 %v2216, 0.6931472
    %v2218 = vlog2.pop %v2205
    %v2219 = vmul.f32 %v2218, 0.6931472
    %v2220 = vlog2.pop %v2206
    %v2221 = vmul.f32 %v2220, 0.6931472
    %v2222 = vlog2.pop %v2207
    %v2223 = vmul.f32 %v2222, 0.6931472
    %v2224 = vadd.f32 %v2160, %v2209
    %v2225 = vadd.f32 %v2161, %v2211
    %v2226 = vadd.f32 %v2162, %v2213
    %v2227 = vadd.f32 %v2163, %v2215
    %v2228 = vadd.f32 %v2164, %v2217
    %v2229 = vadd.f32 %v2165, %v2219
    %v2230 = vadd.f32 %v2166, %v2221
    %v2231 = vadd.f32 %v2167, %v2223
    %v2232 = vsub.f32 0.0, %v2224
    %v2233 = vsub.f32 0.0, %v2225
    %v2234 = vsub.f32 0.0, %v2226
    %v2235 = vsub.f32 0.0, %v2227
    %v2236 = vsub.f32 0.0, %v2228
    %v2237 = vsub.f32 0.0, %v2229
    %v2238 = vsub.f32 0.0, %v2230
    %v2239 = vsub.f32 0.0, %v2231
    %v2240 = vmax.f32 %v2232, -100.0
    %v2241 = vmax.f32 %v2233, -100.0
    %v2242 = vmax.f32 %v2234, -100.0
    %v2243 = vmax.f32 %v2235, -100.0
    %v2244 = vmax.f32 %v2236, -100.0
    %v2245 = vmax.f32 %v2237, -100.0
    %v2246 = vmax.f32 %v2238, -100.0
    %v2247 = vmax.f32 %v2239, -100.0
    %v2256 = vlaneseq
    %v2257 = vshrl.u32 %v2256, 7
    %v2258 = vsub.s32 %v20, %v2257
    %v2259 = vrot.slane %v2152, %v2258
    %v2260 = vlaneseq
    %v2261 = vshrl.u32 %v2260, 7
    %v2262 = vsub.s32 %v20, %v2261
    %v2263 = vrot.slane %v2153, %v2262
    %v2264 = vlaneseq
    %v2265 = vshrl.u32 %v2264, 7
    %v2266 = vsub.s32 %v20, %v2265
    %v2267 = vrot.slane %v2154, %v2266
    %v2268 = vlaneseq
    %v2269 = vshrl.u32 %v2268, 7
    %v2270 = vsub.s32 %v20, %v2269
    %v2271 = vrot.slane %v2155, %v2270
    %v2272 = vlaneseq
    %v2273 = vshrl.u32 %v2272, 7
    %v2274 = vsub.s32 %v20, %v2273
    %v2275 = vrot.slane %v2156, %v2274
    %v2276 = vlaneseq
    %v2277 = vshrl.u32 %v2276, 7
    %v2278 = vsub.s32 %v20, %v2277
    %v2279 = vrot.slane %v2157, %v2278
    %v2280 = vlaneseq
    %v2281 = vshrl.u32 %v2280, 7
    %v2282 = vsub.s32 %v20, %v2281
    %v2283 = vrot.slane %v2158, %v2282
    %v2284 = vlaneseq
    %v2285 = vshrl.u32 %v2284, 7
    %v2286 = vsub.s32 %v20, %v2285
    %v2287 = vrot.slane %v2159, %v2286
    %vm2288 = vcmask 1041409
    %v2289 = vsel %vm2288, %v2263, %v2259
    %vm2290 = vcmask 1042434
    %v2291 = vsel %vm2290, %v2267, %v2289
    %vm2292 = vcmask 1043459
    %v2293 = vsel %vm2292, %v2271, %v2291
    %vm2294 = vcmask 1044484
    %v2295 = vsel %vm2294, %v2275, %v2293
    %vm2296 = vcmask 1045509
    %v2297 = vsel %vm2296, %v2279, %v2295
    %vm2298 = vcmask 1046534
    %v2299 = vsel %vm2298, %v2283, %v2297
    %vm2300 = vcmask 1047559
    %v2301 = vsel %vm2300, %v2287, %v2299
    %v2303 = vmul.f32 %v2063, %v2301
    %v2304 = vsub.f32 1.0, %v2063
    %v2313 = vlaneseq
    %v2314 = vshrl.u32 %v2313, 7
    %v2315 = vsub.s32 %v20, %v2314
    %v2316 = vrot.slane %v2240, %v2315
    %v2317 = vlaneseq
    %v2318 = vshrl.u32 %v2317, 7
    %v2319 = vsub.s32 %v20, %v2318
    %v2320 = vrot.slane %v2241, %v2319
    %v2321 = vlaneseq
    %v2322 = vshrl.u32 %v2321, 7
    %v2323 = vsub.s32 %v20, %v2322
    %v2324 = vrot.slane %v2242, %v2323
    %v2325 = vlaneseq
    %v2326 = vshrl.u32 %v2325, 7
    %v2327 = vsub.s32 %v20, %v2326
    %v2328 = vrot.slane %v2243, %v2327
    %v2329 = vlaneseq
    %v2330 = vshrl.u32 %v2329, 7
    %v2331 = vsub.s32 %v20, %v2330
    %v2332 = vrot.slane %v2244, %v2331
    %v2333 = vlaneseq
    %v2334 = vshrl.u32 %v2333, 7
    %v2335 = vsub.s32 %v20, %v2334
    %v2336 = vrot.slane %v2245, %v2335
    %v2337 = vlaneseq
    %v2338 = vshrl.u32 %v2337, 7
    %v2339 = vsub.s32 %v20, %v2338
    %v2340 = vrot.slane %v2246, %v2339
    %v2341 = vlaneseq
    %v2342 = vshrl.u32 %v2341, 7
    %v2343 = vsub.s32 %v20, %v2342
    %v2344 = vrot.slane %v2247, %v2343
    %v2345 = vsel %vm2288, %v2320, %v2316
    %v2346 = vsel %vm2290, %v2324, %v2345
    %v2347 = vsel %vm2292, %v2328, %v2346
    %v2348 = vsel %vm2294, %v2332, %v2347
    %v2349 = vsel %vm2296, %v2336, %v2348
    %v2350 = vsel %vm2298, %v2340, %v2349
    %v2351 = vsel %vm2300, %v2344, %v2350
    %v2353 = vmul.f32 %v2304, %v2351
    %v2354 = vadd.f32 %v2303, %v2353
    %v2355 = vsub.f32 0.0, %v2354
    %v2356 = vlaneseq
    %v2357 = vshrl.u32 %v2356, 7
    %s2358 = smul.u32 0, 8
    %v2359 = vstv %s2358
    %v2360 = vadd.s32 %v2357, %v2359
    %vm2361 = vcmp.lt.s32.totalorder %v2360, 8
    %v2362 = vsel %vm2361, 1, 0
    %v2363 = vcvt.s32.f32 %v2362
    %v2364 = vmul.f32 %v2355, %v2363
    %vm2365 = vcmask 64512
    %v2366 = vsel %vm2365, %v2364, 0.0
    %2367 = vadd.xlane.f32.xlu0 %v2366
    %v2368 = vpop.xlane.xlu0 %2367
    %v2369 = vrot.slane %v2368, 4
    %v2370 = vadd.f32 %v2368, %v2369
    %v2371 = vrot.slane %v2370, 2
    %v2372 = vadd.f32 %v2370, %v2371
    %v2373 = vrot.slane %v2372, 1
    %v2374 = vadd.f32 %v2372, %v2373
    %s2375 = vtos %v2374
    %s2376 = scalar_lea.smem [#allocation2], 0
    %2377 = sst [smem:[%s2376]] %s2375
    // Predicated region
    $region18: #{tpu_custom_call.1} parent=1 // pred_check
      _
    $region19: #{tpu_custom_call.1} parent=1 // pred_check_branch
      %2379 = sbr.rel (0) target = $region21
    $region20: #{tpu_custom_call.1} parent=1 // pred_region
      %s2381 = ssub.s32 16, 16
      %2382 = vsyncadd [#allocation3], %s2381
      %2385 = dma.smem_to_hbm [#allocation2], 16, %s4, [#allocation3]
    $region21: #{tpu_custom_call.1} parent=1 // pred_fallthru
      _
    // Predicated region
    $region22: #{tpu_custom_call.1} parent=1 // pred_check
      _
    $region23: #{tpu_custom_call.1} parent=1 // pred_check_branch
      %2387 = sbr.rel (0) target = $region25
    $region24: #{tpu_custom_call.1} parent=1 // pred_region
      %2388 = dma.done [#allocation3], 16
    $region25: #{tpu_custom_call.1} parent=1 // pred_fallthru
      _
    %2389 = sfence
    %2390 = vsyncpa [#allocation3], 1

</llo_original>
